<compile_context>
chip_gen: v7x
topology: tpu7x:2x2x1
jax: 0.10.0
libtpu: 0.0.40
codegen_flags: <defaults>
</compile_context>

<pallas_src>
import math
import functools

import jax
import jax.numpy as jnp
import numpy as np
from jax.experimental import pallas as pl
from jax.experimental.pallas import tpu as pltpu


# ----------------------------------------------------------------------------
# Fused Pallas kernel: conv-q, conv-k, linear-v, masked MHA, output linear
# ----------------------------------------------------------------------------
def _fused_mha_temporal_kernel(bias_ref, q_ref, k_ref, v_ref,
                               wq_ref, bq_ref, wk_ref, bk_ref,
                               wv_ref, bv_ref, wo_ref, bo_ref,
                               o_ref, *, K, T, h, dk, scale):
    NB, Tp, D = q_ref.shape               # node-block, padded time, d_model
    KD = K * D
    f32, bf16 = jnp.float32, jnp.bfloat16

    def conv_proj(xp, w_ref, b_ref):
        # "same" temporal conv along T as a single im2col matmul.
        # xp: (NB, Tp, D) f32, already zero-padded along T in the wrapper.
        # w_ref: (K*D, D) bf16 (tap-major rows), b_ref: (1, D) f32.
        cols = [xp[:, kk:kk + T, :] for kk in range(K)]          # K x (NB,T,D)
        xs = jnp.concatenate(cols, axis=-1).reshape(NB * T, KD).astype(bf16)
        return jnp.dot(xs, w_ref[...], preferred_element_type=f32) + b_ref[...]

    q = conv_proj(q_ref[...], wq_ref, bq_ref)                    # (NB*T, D) f32
    k = conv_proj(k_ref[...], wk_ref, bk_ref)
    v = jnp.dot(v_ref[...].reshape(NB * T, D).astype(bf16), wv_ref[...],
                preferred_element_type=f32) + bv_ref[...]

    def split_heads(x2d):
        # (NB*T, D) -> (h*NB, T, dk): all heads batched into one leading dim.
        x3 = x2d.reshape(NB, T, D)
        return jnp.concatenate(
            [x3[:, :, hd * dk:(hd + 1) * dk] for hd in range(h)], axis=0)

    qh = split_heads(q).astype(bf16)
    kh = split_heads(k).astype(bf16)
    vh = split_heads(v).astype(bf16)

    # additive mask bias, precomputed in the wrapper: 0 keep, -1e9 masked
    bias = bias_ref[...][None, :, :]                              # (1, T, T)

    s = jnp.einsum("btd,bsd->bts", qh, kh,
                   preferred_element_type=f32) * scale            # (h*NB, T, T)
    s = s + bias
    s = s - jnp.max(s, axis=-1, keepdims=True)
    p = jnp.exp(s)
    p = p * pl.reciprocal(jnp.sum(p, axis=-1, keepdims=True), approx=True)
    ctx = jnp.einsum("bts,bsd->btd", p.astype(bf16), vh,
                     preferred_element_type=f32)                  # (h*NB, T, dk)

    # merge heads back to head-major channel order, then output projection
    x = jnp.concatenate([ctx[hd * NB:(hd + 1) * NB] for hd in range(h)],
                        axis=-1)                                  # (NB, T, D)
    y = jnp.dot(x.reshape(NB * T, D).astype(bf16), wo_ref[...],
                preferred_element_type=f32) + bo_ref[...]         # (NB*T, D)

    # lane-dense store: (NB, T*D) so the last output dim is >= 128 wide
    y3 = y.reshape(NB, T, D)
    o_ref[...] = jnp.concatenate([y3[:, t, :] for t in range(T)],
                                 axis=-1).astype(o_ref.dtype)


# ----------------------------------------------------------------------------
# Module
# ----------------------------------------------------------------------------
class MHAttnTemporalContext_q1d_k1d:
    """JAX/Pallas port of MultiHeadAttentionAwareTemporalContex_q1d_k1d."""

    def __init__(self, nb_head, d_model, kernel_size=3, dropout=0.0, key=None,
                 node_block=512, out_dtype=jnp.float32):
        assert d_model % nb_head == 0
        self.d_k = d_model // nb_head
        self.h = nb_head
        self.d_model = d_model
        self.kernel_size = kernel_size
        self.padding = (kernel_size - 1) // 2
        # nodes fused per grid step; large to amortize per-step overhead and
        # fill the MXU (M = node_block * T). Multiple of 8 for tiling.
        self.node_block = node_block
        self.out_dtype = out_dtype   # set to jnp.bfloat16 to halve HBM writeback
        # TODO(synk): dropout p>0 not implemented (module is used with p=0.0 -> identity).
        assert dropout == 0.0
        # TODO(synk): attention matrix (self.attn in PyTorch) is not returned/stored.
        # TODO(synk): q/k/v weight stacking for the self-attention (query is key is value)
        #             path is not implemented; would further improve MXU column use.

        keys = jax.random.split(key, 8)

        def uni(kk, shape, fan_in):
            bound = 1.0 / math.sqrt(fan_in)
            return jax.random.uniform(kk, shape, jnp.float32, -bound, bound)

        d = d_model
        K = kernel_size
        # two Linear(d_model, d_model): weight (out, in), bias (out,)
        self.lin_w = [uni(keys[0], (d, d), d), uni(keys[1], (d, d), d)]
        self.lin_b = [uni(keys[2], (d,), d), uni(keys[3], (d,), d)]
        # two Conv2d(d_model, d_model, (1, K)): weight (out, in, 1, K), bias (out,)
        fan_conv = d * K
        self.conv_w = [uni(keys[4], (d, d, 1, K), fan_conv),
                       uni(keys[5], (d, d, 1, K), fan_conv)]
        self.conv_b = [uni(keys[6], (d,), fan_conv), uni(keys[7], (d,), fan_conv)]

        # --- kernel-layout copies, hoisted out of the forward ---------------
        # conv taps (K, in, out) -> im2col weight (K*in, out), bf16 MXU operand
        wq_taps = jnp.transpose(self.conv_w[0][:, :, 0, :], (2, 1, 0))
        wk_taps = jnp.transpose(self.conv_w[1][:, :, 0, :], (2, 1, 0))
        self.wq_im2col = wq_taps.reshape(K * d, d).astype(jnp.bfloat16)
        self.wk_im2col = wk_taps.reshape(K * d, d).astype(jnp.bfloat16)
        # linear weights as (in, out)
        self.wv_mat = self.lin_w[0].T.astype(jnp.bfloat16)
        self.wo_mat = self.lin_w[1].T.astype(jnp.bfloat16)
        # biases as (1, D) f32
        self.bq2 = self.conv_b[0].reshape(1, d)
        self.bk2 = self.conv_b[1].reshape(1, d)
        self.bv2 = self.lin_b[0].reshape(1, d)
        self.bo2 = self.lin_b[1].reshape(1, d)

    def __call__(self, query, key, value, mask=None):
        batch, N, T, D = query.shape
        assert D == self.d_model
        K, pad = self.kernel_size, self.padding
        Tp = T + 2 * pad
        NB = min(N, self.node_block)
        n_blocks = pl.cdiv(N, NB)

        # additive mask bias: 0 where keep, -1e9 where masked (mask in {0,1})
        if mask is None:
            bias = jnp.zeros((batch, T, T), jnp.float32)
        else:
            bias = (mask.astype(jnp.float32) - 1.0) * 1e9

        # pad q/k along T once in HBM (no in-kernel zero concat / unaligned pads)
        q_pad = jnp.pad(query, ((0, 0), (0, 0), (pad, pad), (0, 0)))
        k_pad = jnp.pad(key, ((0, 0), (0, 0), (pad, pad), (0, 0)))

        kernel = functools.partial(
            _fused_mha_temporal_kernel,
            K=K, T=T, h=self.h, dk=self.d_k, scale=1.0 / math.sqrt(self.d_k))

        qk_spec = pl.BlockSpec((pl.Squeezed(), NB, Tp, D), lambda b, n: (b, n, 0, 0))
        v_spec = pl.BlockSpec((pl.Squeezed(), NB, T, D), lambda b, n: (b, n, 0, 0))
        bias_spec = pl.BlockSpec((pl.Squeezed(), T, T), lambda b, n: (b, 0, 0))
        convw_spec = pl.BlockSpec((K * D, D), lambda b, n: (0, 0))
        mat_spec = pl.BlockSpec((D, D), lambda b, n: (0, 0))
        vec_spec = pl.BlockSpec((1, D), lambda b, n: (0, 0))
        out_spec = pl.BlockSpec((pl.Squeezed(), NB, T * D), lambda b, n: (b, n, 0))

        # explicit VMEM budget: double-buffered I/O blocks + weights + generous
        # allowance for f32 intermediates; capped below v7x's 64 MiB physical.
        io_bytes = 2 * 4 * NB * (2 * Tp * D + T * D + T * D)
        w_bytes = 2 * (2 * K * D * D + 2 * D * D) + 4 * (4 * D + T * T)
        interm_bytes = 4 * (NB * T * (2 * K * D + 6 * D) + 3 * self.h * NB * T * T)
        vmem_bytes = int(min(max(2 * (io_bytes + w_bytes + interm_bytes), 32 << 20),
                             56 << 20))

        out_flat = pl.pallas_call(
            kernel,
            out_shape=jax.ShapeDtypeStruct((batch, N, T * D), self.out_dtype),
            grid=(batch, n_blocks),
            in_specs=[bias_spec, qk_spec, qk_spec, v_spec,
                      convw_spec, vec_spec, convw_spec, vec_spec,
                      mat_spec, vec_spec, mat_spec, vec_spec],
            out_specs=out_spec,
            compiler_params=pltpu.CompilerParams(
                dimension_semantics=("parallel", "parallel"),
                vmem_limit_bytes=vmem_bytes),
        )(bias, q_pad, k_pad, value,
          self.wq_im2col, self.bq2, self.wk_im2col, self.bk2,
          self.wv_mat, self.bv2, self.wo_mat, self.bo2)

        return out_flat.reshape(batch, N, T, D)


# ----------------------------------------------------------------------------
# Pure-JAX reference (matches the PyTorch forward)
# ----------------------------------------------------------------------------
def reference_forward(m, query, key, value, mask):
    batch, N, T, D = query.shape
    h, dk, K, pad = m.h, m.d_k, m.kernel_size, m.padding

    def conv(x, w, b):
        xp = jnp.pad(x, ((0, 0), (0, 0), (pad, pad), (0, 0)))
        unf = jnp.stack([xp[:, :, kk:kk + T, :] for kk in range(K)], axis=3)
        w_mat = jnp.transpose(w[:, :, 0, :], (2, 1, 0)).reshape(K * D, D)
        return unf.reshape(batch, N, T, K * D) @ w_mat + b

    q = conv(query, m.conv_w[0], m.conv_b[0])
    k = conv(key, m.conv_w[1], m.conv_b[1])
    v = value @ m.lin_w[0].T + m.lin_b[0]

    def split(x):
        return jnp.transpose(x.reshape(batch, N, T, h, dk), (0, 1, 3, 2, 4))

    qh, kh, vh = split(q), split(k), split(v)
    scores = jnp.einsum("bnhtd,bnhsd->bnhts", qh, kh) / math.sqrt(dk)
    scores = jnp.where(mask[:, None, None, :, :] == 0, -1000000000.0, scores)
    p = jax.nn.softmax(scores, axis=-1)
    x = jnp.einsum("bnhts,bnhsd->bnhtd", p, vh)
    x = jnp.transpose(x, (0, 1, 3, 2, 4)).reshape(batch, N, T, D)
    return x @ m.lin_w[1].T + m.lin_b[1]


# ----------------------------------------------------------------------------
if __name__ == "__main__":
    batch, N, T, d_model, nb_head = 2, 3, 8, 32, 4

    key = jax.random.PRNGKey(0)
    k1, k2, k3 = jax.random.split(key, 3)
    query = jax.random.normal(k1, (batch, N, T, d_model), jnp.float32)
    key_t = jax.random.normal(k2, (batch, N, T, d_model), jnp.float32)
    value = jax.random.normal(k3, (batch, N, T, d_model), jnp.float32)
    # mask: (batch, T, T), 1 = attend, 0 = masked (causal-style for the demo)
    mask = jnp.broadcast_to(jnp.tril(jnp.ones((T, T), jnp.float32)), (batch, T, T))

    model = MHAttnTemporalContext_q1d_k1d(
        nb_head=nb_head, d_model=d_model, kernel_size=3, dropout=0.0,
        key=jax.random.PRNGKey(42),
    )

    out = model(query, key_t, value, mask)
    out = jax.block_until_ready(out)
    assert out.shape == (batch, N, T, d_model)

    ref = reference_forward(model, query, key_t, value, mask)
    # kernel uses bf16 MXU operands (f32 accumulation) -> slightly looser tolerance
    np.testing.assert_allclose(np.asarray(out), np.asarray(ref), rtol=5e-2, atol=5e-2)

    print("KERNEL_OK")
</pallas_src>

<mosaic_0001>
module attributes {stable_mosaic.version = 11 : i64} {
  func.func @_fused_mha_temporal_kernel(%arg0: i32, %arg1: i32, %arg2: memref<1x8x8xf32, #tpu.memory_space<vmem>>, %arg3: memref<1x3x10x32xf32, #tpu.memory_space<vmem>>, %arg4: memref<1x3x10x32xf32, #tpu.memory_space<vmem>>, %arg5: memref<1x3x8x32xf32, #tpu.memory_space<vmem>>, %arg6: memref<96x32xbf16, #tpu.memory_space<vmem>>, %arg7: memref<1x32xf32, #tpu.memory_space<vmem>>, %arg8: memref<96x32xbf16, #tpu.memory_space<vmem>>, %arg9: memref<1x32xf32, #tpu.memory_space<vmem>>, %arg10: memref<32x32xbf16, #tpu.memory_space<vmem>>, %arg11: memref<1x32xf32, #tpu.memory_space<vmem>>, %arg12: memref<32x32xbf16, #tpu.memory_space<vmem>>, %arg13: memref<1x32xf32, #tpu.memory_space<vmem>>, %arg14: memref<1x3x256xf32, #tpu.memory_space<vmem>>) attributes {dimension_semantics = [#tpu.dimension_semantics<parallel>, #tpu.dimension_semantics<parallel>], iteration_bounds = array<i64: 2, 1>, scalar_prefetch = 0 : i64, scratch_operands = 0 : i64, tpu.core_type = #tpu.core_type<tc>, window_params = [{transform_indices = @transform_0, window_bounds = array<i64: 1, 8, 8>}, {transform_indices = @transform_1, window_bounds = array<i64: 1, 3, 10, 32>}, {transform_indices = @transform_2, window_bounds = array<i64: 1, 3, 10, 32>}, {transform_indices = @transform_3, window_bounds = array<i64: 1, 3, 8, 32>}, {pipeline_mode = #tpu.pipeline_mode<synchronous>, transform_indices = @transform_4, window_bounds = array<i64: 96, 32>}, {pipeline_mode = #tpu.pipeline_mode<synchronous>, transform_indices = @transform_5, window_bounds = array<i64: 1, 32>}, {pipeline_mode = #tpu.pipeline_mode<synchronous>, transform_indices = @transform_6, window_bounds = array<i64: 96, 32>}, {pipeline_mode = #tpu.pipeline_mode<synchronous>, transform_indices = @transform_7, window_bounds = array<i64: 1, 32>}, {pipeline_mode = #tpu.pipeline_mode<synchronous>, transform_indices = @transform_8, window_bounds = array<i64: 32, 32>}, {pipeline_mode = #tpu.pipeline_mode<synchronous>, transform_indices = @transform_9, window_bounds = array<i64: 1, 32>}, {pipeline_mode = #tpu.pipeline_mode<synchronous>, transform_indices = @transform_10, window_bounds = array<i64: 32, 32>}, {pipeline_mode = #tpu.pipeline_mode<synchronous>, transform_indices = @transform_11, window_bounds = array<i64: 1, 32>}, {transform_indices = @transform_12, window_bounds = array<i64: 1, 3, 256>}]} {
    %c0 = arith.constant 0 : index
    %c0_0 = arith.constant 0 : index
    %c0_1 = arith.constant 0 : index
    %c0_2 = arith.constant 0 : index
    %0 = vector.load %arg3[%c0, %c0_0, %c0_1, %c0_2] : memref<1x3x10x32xf32, #tpu.memory_space<vmem>>, vector<1x3x10x32xf32>
    %1 = vector.shape_cast %0 : vector<1x3x10x32xf32> to vector<3x10x32xf32>
    %2 = vector.extract_strided_slice %1 {offsets = [0, 0, 0], sizes = [3, 8, 32], strides = [1, 1, 1]} : vector<3x10x32xf32> to vector<3x8x32xf32>
    %3 = vector.extract_strided_slice %1 {offsets = [0, 1, 0], sizes = [3, 8, 32], strides = [1, 1, 1]} : vector<3x10x32xf32> to vector<3x8x32xf32>
    %4 = vector.extract_strided_slice %1 {offsets = [0, 2, 0], sizes = [3, 8, 32], strides = [1, 1, 1]} : vector<3x10x32xf32> to vector<3x8x32xf32>
    %5 = tpu.concatenate %2, %3, %4 in 2 : vector<3x8x32xf32>, vector<3x8x32xf32>, vector<3x8x32xf32> -> vector<3x8x96xf32>
    %6 = vector.shape_cast %5 : vector<3x8x96xf32> to vector<24x96xf32>
    %7 = arith.truncf %6 : vector<24x96xf32> to vector<24x96xbf16>
    %c0_3 = arith.constant 0 : index
    %c0_4 = arith.constant 0 : index
    %8 = vector.load %arg6[%c0_3, %c0_4] : memref<96x32xbf16, #tpu.memory_space<vmem>>, vector<96x32xbf16>
    %cst = arith.constant dense<0.000000e+00> : vector<24x32xf32>
    %9 = tpu.matmul %7, %8, %cst {dimension_numbers = #tpu.dot_dimension_numbers<[1], [0], [0], [1], [0, 0, 1, 1], [], []>} : vector<24x96xbf16>, vector<96x32xbf16>, vector<24x32xf32> -> vector<24x32xf32>
    %c0_5 = arith.constant 0 : index
    %c0_6 = arith.constant 0 : index
    %10 = vector.load %arg7[%c0_5, %c0_6] : memref<1x32xf32, #tpu.memory_space<vmem>>, vector<1x32xf32>
    %11 = vector.broadcast %10 : vector<1x32xf32> to vector<24x32xf32>
    %12 = arith.addf %9, %11 : vector<24x32xf32>
    %c0_7 = arith.constant 0 : index
    %c0_8 = arith.constant 0 : index
    %c0_9 = arith.constant 0 : index
    %c0_10 = arith.constant 0 : index
    %13 = vector.load %arg4[%c0_7, %c0_8, %c0_9, %c0_10] : memref<1x3x10x32xf32, #tpu.memory_space<vmem>>, vector<1x3x10x32xf32>
    %14 = vector.shape_cast %13 : vector<1x3x10x32xf32> to vector<3x10x32xf32>
    %15 = vector.extract_strided_slice %14 {offsets = [0, 0, 0], sizes = [3, 8, 32], strides = [1, 1, 1]} : vector<3x10x32xf32> to vector<3x8x32xf32>
    %16 = vector.extract_strided_slice %14 {offsets = [0, 1, 0], sizes = [3, 8, 32], strides = [1, 1, 1]} : vector<3x10x32xf32> to vector<3x8x32xf32>
    %17 = vector.extract_strided_slice %14 {offsets = [0, 2, 0], sizes = [3, 8, 32], strides = [1, 1, 1]} : vector<3x10x32xf32> to vector<3x8x32xf32>
    %18 = tpu.concatenate %15, %16, %17 in 2 : vector<3x8x32xf32>, vector<3x8x32xf32>, vector<3x8x32xf32> -> vector<3x8x96xf32>
    %19 = vector.shape_cast %18 : vector<3x8x96xf32> to vector<24x96xf32>
    %20 = arith.truncf %19 : vector<24x96xf32> to vector<24x96xbf16>
    %c0_11 = arith.constant 0 : index
    %c0_12 = arith.constant 0 : index
    %21 = vector.load %arg8[%c0_11, %c0_12] : memref<96x32xbf16, #tpu.memory_space<vmem>>, vector<96x32xbf16>
    %cst_13 = arith.constant dense<0.000000e+00> : vector<24x32xf32>
    %22 = tpu.matmul %20, %21, %cst_13 {dimension_numbers = #tpu.dot_dimension_numbers<[1], [0], [0], [1], [0, 0, 1, 1], [], []>} : vector<24x96xbf16>, vector<96x32xbf16>, vector<24x32xf32> -> vector<24x32xf32>
    %c0_14 = arith.constant 0 : index
    %c0_15 = arith.constant 0 : index
    %23 = vector.load %arg9[%c0_14, %c0_15] : memref<1x32xf32, #tpu.memory_space<vmem>>, vector<1x32xf32>
    %24 = vector.broadcast %23 : vector<1x32xf32> to vector<24x32xf32>
    %25 = arith.addf %22, %24 : vector<24x32xf32>
    %c0_16 = arith.constant 0 : index
    %c0_17 = arith.constant 0 : index
    %c0_18 = arith.constant 0 : index
    %c0_19 = arith.constant 0 : index
    %26 = vector.load %arg5[%c0_16, %c0_17, %c0_18, %c0_19] : memref<1x3x8x32xf32, #tpu.memory_space<vmem>>, vector<1x3x8x32xf32>
    %27 = vector.shape_cast %26 : vector<1x3x8x32xf32> to vector<3x8x32xf32>
    %28 = vector.shape_cast %27 : vector<3x8x32xf32> to vector<24x32xf32>
    %29 = arith.truncf %28 : vector<24x32xf32> to vector<24x32xbf16>
    %c0_20 = arith.constant 0 : index
    %c0_21 = arith.constant 0 : index
    %30 = vector.load %arg10[%c0_20, %c0_21] : memref<32x32xbf16, #tpu.memory_space<vmem>>, vector<32x32xbf16>
    %cst_22 = arith.constant dense<0.000000e+00> : vector<24x32xf32>
    %31 = tpu.matmul %29, %30, %cst_22 {dimension_numbers = #tpu.dot_dimension_numbers<[1], [0], [0], [1], [0, 0, 1, 1], [], []>} : vector<24x32xbf16>, vector<32x32xbf16>, vector<24x32xf32> -> vector<24x32xf32>
    %c0_23 = arith.constant 0 : index
    %c0_24 = arith.constant 0 : index
    %32 = vector.load %arg11[%c0_23, %c0_24] : memref<1x32xf32, #tpu.memory_space<vmem>>, vector<1x32xf32>
    %33 = vector.broadcast %32 : vector<1x32xf32> to vector<24x32xf32>
    %34 = arith.addf %31, %33 : vector<24x32xf32>
    %35 = vector.shape_cast %12 : vector<24x32xf32> to vector<3x8x32xf32>
    %36 = vector.extract_strided_slice %35 {offsets = [0, 0, 0], sizes = [3, 8, 8], strides = [1, 1, 1]} : vector<3x8x32xf32> to vector<3x8x8xf32>
    %37 = vector.extract_strided_slice %35 {offsets = [0, 0, 8], sizes = [3, 8, 8], strides = [1, 1, 1]} : vector<3x8x32xf32> to vector<3x8x8xf32>
    %38 = vector.extract_strided_slice %35 {offsets = [0, 0, 16], sizes = [3, 8, 8], strides = [1, 1, 1]} : vector<3x8x32xf32> to vector<3x8x8xf32>
    %39 = vector.extract_strided_slice %35 {offsets = [0, 0, 24], sizes = [3, 8, 8], strides = [1, 1, 1]} : vector<3x8x32xf32> to vector<3x8x8xf32>
    %40 = tpu.concatenate %36, %37, %38, %39 in 0 : vector<3x8x8xf32>, vector<3x8x8xf32>, vector<3x8x8xf32>, vector<3x8x8xf32> -> vector<12x8x8xf32>
    %41 = arith.truncf %40 : vector<12x8x8xf32> to vector<12x8x8xbf16>
    %42 = vector.shape_cast %25 : vector<24x32xf32> to vector<3x8x32xf32>
    %43 = vector.extract_strided_slice %42 {offsets = [0, 0, 0], sizes = [3, 8, 8], strides = [1, 1, 1]} : vector<3x8x32xf32> to vector<3x8x8xf32>
    %44 = vector.extract_strided_slice %42 {offsets = [0, 0, 8], sizes = [3, 8, 8], strides = [1, 1, 1]} : vector<3x8x32xf32> to vector<3x8x8xf32>
    %45 = vector.extract_strided_slice %42 {offsets = [0, 0, 16], sizes = [3, 8, 8], strides = [1, 1, 1]} : vector<3x8x32xf32> to vector<3x8x8xf32>
    %46 = vector.extract_strided_slice %42 {offsets = [0, 0, 24], sizes = [3, 8, 8], strides = [1, 1, 1]} : vector<3x8x32xf32> to vector<3x8x8xf32>
    %47 = tpu.concatenate %43, %44, %45, %46 in 0 : vector<3x8x8xf32>, vector<3x8x8xf32>, vector<3x8x8xf32>, vector<3x8x8xf32> -> vector<12x8x8xf32>
    %48 = arith.truncf %47 : vector<12x8x8xf32> to vector<12x8x8xbf16>
    %49 = vector.shape_cast %34 : vector<24x32xf32> to vector<3x8x32xf32>
    %50 = vector.extract_strided_slice %49 {offsets = [0, 0, 0], sizes = [3, 8, 8], strides = [1, 1, 1]} : vector<3x8x32xf32> to vector<3x8x8xf32>
    %51 = vector.extract_strided_slice %49 {offsets = [0, 0, 8], sizes = [3, 8, 8], strides = [1, 1, 1]} : vector<3x8x32xf32> to vector<3x8x8xf32>
    %52 = vector.extract_strided_slice %49 {offsets = [0, 0, 16], sizes = [3, 8, 8], strides = [1, 1, 1]} : vector<3x8x32xf32> to vector<3x8x8xf32>
    %53 = vector.extract_strided_slice %49 {offsets = [0, 0, 24], sizes = [3, 8, 8], strides = [1, 1, 1]} : vector<3x8x32xf32> to vector<3x8x8xf32>
    %54 = tpu.concatenate %50, %51, %52, %53 in 0 : vector<3x8x8xf32>, vector<3x8x8xf32>, vector<3x8x8xf32>, vector<3x8x8xf32> -> vector<12x8x8xf32>
    %55 = arith.truncf %54 : vector<12x8x8xf32> to vector<12x8x8xbf16>
    %c0_25 = arith.constant 0 : index
    %c0_26 = arith.constant 0 : index
    %c0_27 = arith.constant 0 : index
    %56 = vector.load %arg2[%c0_25, %c0_26, %c0_27] : memref<1x8x8xf32, #tpu.memory_space<vmem>>, vector<1x8x8xf32>
    %57 = vector.shape_cast %56 : vector<1x8x8xf32> to vector<8x8xf32>
    %58 = vector.shape_cast %57 : vector<8x8xf32> to vector<1x8x8xf32>
    "tpu.trace_start"() <{level = 10 : i32, message = "btd,bsd->bts"}> : () -> ()
    %cst_28 = arith.constant dense<0.000000e+00> : vector<12x8x8xf32>
    %59 = tpu.matmul %41, %48, %cst_28 {dimension_numbers = #tpu.dot_dimension_numbers<[2], [2], [1], [1], [0, 0, 0, 1, 1, 1], [0], [0]>} : vector<12x8x8xbf16>, vector<12x8x8xbf16>, vector<12x8x8xf32> -> vector<12x8x8xf32>
    "tpu.trace_stop"() : () -> ()
    %cst_29 = arith.constant 0.353553385 : f32
    %60 = vector.broadcast %cst_29 : f32 to vector<12x8x8xf32>
    %61 = arith.mulf %59, %60 : vector<12x8x8xf32>
    %62 = vector.broadcast %58 : vector<1x8x8xf32> to vector<12x8x8xf32>
    %63 = arith.addf %61, %62 : vector<12x8x8xf32>
    %cst_30 = arith.constant dense<0xFF800000> : vector<12x8xf32>
    %64 = vector.multi_reduction <maximumf>, %63, %cst_30 [2] : vector<12x8x8xf32> to vector<12x8xf32>
    %65 = vector.shape_cast %64 : vector<12x8xf32> to vector<12x8x1xf32>
    %66 = vector.broadcast %65 : vector<12x8x1xf32> to vector<12x8x8xf32>
    %67 = arith.subf %63, %66 : vector<12x8x8xf32>
    %68 = math.exp %67 : vector<12x8x8xf32>
    %cst_31 = arith.constant dense<0.000000e+00> : vector<12x8xf32>
    %69 = vector.multi_reduction <add>, %68, %cst_31 [2] : vector<12x8x8xf32> to vector<12x8xf32>
    %70 = vector.shape_cast %69 : vector<12x8xf32> to vector<12x8x1xf32>
    %71 = tpu.reciprocal %70 {approx = true} : vector<12x8x1xf32> -> vector<12x8x1xf32>
    %72 = vector.broadcast %71 : vector<12x8x1xf32> to vector<12x8x8xf32>
    %73 = arith.mulf %68, %72 : vector<12x8x8xf32>
    %74 = arith.truncf %73 : vector<12x8x8xf32> to vector<12x8x8xbf16>
    "tpu.trace_start"() <{level = 10 : i32, message = "bts,bsd->btd"}> : () -> ()
    %cst_32 = arith.constant dense<0.000000e+00> : vector<12x8x8xf32>
    %75 = tpu.matmul %74, %55, %cst_32 {dimension_numbers = #tpu.dot_dimension_numbers<[2], [1], [1], [2], [0, 0, 0, 1, 1, 2], [0], [0]>} : vector<12x8x8xbf16>, vector<12x8x8xbf16>, vector<12x8x8xf32> -> vector<12x8x8xf32>
    "tpu.trace_stop"() : () -> ()
    %76 = vector.extract_strided_slice %75 {offsets = [0, 0, 0], sizes = [3, 8, 8], strides = [1, 1, 1]} : vector<12x8x8xf32> to vector<3x8x8xf32>
    %77 = vector.extract_strided_slice %75 {offsets = [3, 0, 0], sizes = [3, 8, 8], strides = [1, 1, 1]} : vector<12x8x8xf32> to vector<3x8x8xf32>
    %78 = vector.extract_strided_slice %75 {offsets = [6, 0, 0], sizes = [3, 8, 8], strides = [1, 1, 1]} : vector<12x8x8xf32> to vector<3x8x8xf32>
    %79 = vector.extract_strided_slice %75 {offsets = [9, 0, 0], sizes = [3, 8, 8], strides = [1, 1, 1]} : vector<12x8x8xf32> to vector<3x8x8xf32>
    %80 = tpu.concatenate %76, %77, %78, %79 in 2 : vector<3x8x8xf32>, vector<3x8x8xf32>, vector<3x8x8xf32>, vector<3x8x8xf32> -> vector<3x8x32xf32>
    %81 = vector.shape_cast %80 : vector<3x8x32xf32> to vector<24x32xf32>
    %82 = arith.truncf %81 : vector<24x32xf32> to vector<24x32xbf16>
    %c0_33 = arith.constant 0 : index
    %c0_34 = arith.constant 0 : index
    %83 = vector.load %arg12[%c0_33, %c0_34] : memref<32x32xbf16, #tpu.memory_space<vmem>>, vector<32x32xbf16>
    %cst_35 = arith.constant dense<0.000000e+00> : vector<24x32xf32>
    %84 = tpu.matmul %82, %83, %cst_35 {dimension_numbers = #tpu.dot_dimension_numbers<[1], [0], [0], [1], [0, 0, 1, 1], [], []>} : vector<24x32xbf16>, vector<32x32xbf16>, vector<24x32xf32> -> vector<24x32xf32>
    %c0_36 = arith.constant 0 : index
    %c0_37 = arith.constant 0 : index
    %85 = vector.load %arg13[%c0_36, %c0_37] : memref<1x32xf32, #tpu.memory_space<vmem>>, vector<1x32xf32>
    %86 = vector.broadcast %85 : vector<1x32xf32> to vector<24x32xf32>
    %87 = arith.addf %84, %86 : vector<24x32xf32>
    %88 = vector.shape_cast %87 : vector<24x32xf32> to vector<3x8x32xf32>
    %89 = vector.extract_strided_slice %88 {offsets = [0, 0, 0], sizes = [3, 1, 32], strides = [1, 1, 1]} : vector<3x8x32xf32> to vector<3x1x32xf32>
    %90 = vector.shape_cast %89 : vector<3x1x32xf32> to vector<3x32xf32>
    %91 = vector.extract_strided_slice %88 {offsets = [0, 1, 0], sizes = [3, 1, 32], strides = [1, 1, 1]} : vector<3x8x32xf32> to vector<3x1x32xf32>
    %92 = vector.shape_cast %91 : vector<3x1x32xf32> to vector<3x32xf32>
    %93 = vector.extract_strided_slice %88 {offsets = [0, 2, 0], sizes = [3, 1, 32], strides = [1, 1, 1]} : vector<3x8x32xf32> to vector<3x1x32xf32>
    %94 = vector.shape_cast %93 : vector<3x1x32xf32> to vector<3x32xf32>
    %95 = vector.extract_strided_slice %88 {offsets = [0, 3, 0], sizes = [3, 1, 32], strides = [1, 1, 1]} : vector<3x8x32xf32> to vector<3x1x32xf32>
    %96 = vector.shape_cast %95 : vector<3x1x32xf32> to vector<3x32xf32>
    %97 = vector.extract_strided_slice %88 {offsets = [0, 4, 0], sizes = [3, 1, 32], strides = [1, 1, 1]} : vector<3x8x32xf32> to vector<3x1x32xf32>
    %98 = vector.shape_cast %97 : vector<3x1x32xf32> to vector<3x32xf32>
    %99 = vector.extract_strided_slice %88 {offsets = [0, 5, 0], sizes = [3, 1, 32], strides = [1, 1, 1]} : vector<3x8x32xf32> to vector<3x1x32xf32>
    %100 = vector.shape_cast %99 : vector<3x1x32xf32> to vector<3x32xf32>
    %101 = vector.extract_strided_slice %88 {offsets = [0, 6, 0], sizes = [3, 1, 32], strides = [1, 1, 1]} : vector<3x8x32xf32> to vector<3x1x32xf32>
    %102 = vector.shape_cast %101 : vector<3x1x32xf32> to vector<3x32xf32>
    %103 = vector.extract_strided_slice %88 {offsets = [0, 7, 0], sizes = [3, 1, 32], strides = [1, 1, 1]} : vector<3x8x32xf32> to vector<3x1x32xf32>
    %104 = vector.shape_cast %103 : vector<3x1x32xf32> to vector<3x32xf32>
    %105 = tpu.concatenate %90, %92, %94, %96, %98, %100, %102, %104 in 1 : vector<3x32xf32>, vector<3x32xf32>, vector<3x32xf32>, vector<3x32xf32>, vector<3x32xf32>, vector<3x32xf32>, vector<3x32xf32>, vector<3x32xf32> -> vector<3x256xf32>
    %c0_38 = arith.constant 0 : index
    %c0_39 = arith.constant 0 : index
    %c0_40 = arith.constant 0 : index
    %106 = vector.load %arg14[%c0_38, %c0_39, %c0_40] : memref<1x3x256xf32, #tpu.memory_space<vmem>>, vector<1x3x256xf32>
    %107 = vector.shape_cast %106 : vector<1x3x256xf32> to vector<3x256xf32>
    %108 = vector.shape_cast %105 : vector<3x256xf32> to vector<1x3x256xf32>
    tpu.vector_store %arg14[%c0_38, %c0_39, %c0_40], %108 {strides = array<i32>} : memref<1x3x256xf32, #tpu.memory_space<vmem>>, vector<1x3x256xf32>,
    return
  }
  func.func @transform_0(%arg0: i32, %arg1: i32) -> (i32, i32, i32) {
    %c0_i32 = arith.constant 0 : i32
    %c0_i32_0 = arith.constant 0 : i32
    %c0_i32_1 = arith.constant 0 : i32
    return %arg0, %c0_i32, %c0_i32_0 : i32, i32, i32
  }
  func.func @transform_1(%arg0: i32, %arg1: i32) -> (i32, i32, i32, i32) {
    %c0_i32 = arith.constant 0 : i32
    %c0_i32_0 = arith.constant 0 : i32
    %c0_i32_1 = arith.constant 0 : i32
    return %arg0, %arg1, %c0_i32, %c0_i32_0 : i32, i32, i32, i32
  }
  func.func @transform_2(%arg0: i32, %arg1: i32) -> (i32, i32, i32, i32) {
    %c0_i32 = arith.constant 0 : i32
    %c0_i32_0 = arith.constant 0 : i32
    %c0_i32_1 = arith.constant 0 : i32
    return %arg0, %arg1, %c0_i32, %c0_i32_0 : i32, i32, i32, i32
  }
  func.func @transform_3(%arg0: i32, %arg1: i32) -> (i32, i32, i32, i32) {
    %c0_i32 = arith.constant 0 : i32
    %c0_i32_0 = arith.constant 0 : i32
    %c0_i32_1 = arith.constant 0 : i32
    return %arg0, %arg1, %c0_i32, %c0_i32_0 : i32, i32, i32, i32
  }
  func.func @transform_4(%arg0: i32, %arg1: i32) -> (i32, i32) {
    %c0_i32 = arith.constant 0 : i32
    %c0_i32_0 = arith.constant 0 : i32
    %c0_i32_1 = arith.constant 0 : i32
    return %c0_i32, %c0_i32_0 : i32, i32
  }
  func.func @transform_5(%arg0: i32, %arg1: i32) -> (i32, i32) {
    %c0_i32 = arith.constant 0 : i32
    %c0_i32_0 = arith.constant 0 : i32
    %c0_i32_1 = arith.constant 0 : i32
    return %c0_i32, %c0_i32_0 : i32, i32
  }
  func.func @transform_6(%arg0: i32, %arg1: i32) -> (i32, i32) {
    %c0_i32 = arith.constant 0 : i32
    %c0_i32_0 = arith.constant 0 : i32
    %c0_i32_1 = arith.constant 0 : i32
    return %c0_i32, %c0_i32_0 : i32, i32
  }
  func.func @transform_7(%arg0: i32, %arg1: i32) -> (i32, i32) {
    %c0_i32 = arith.constant 0 : i32
    %c0_i32_0 = arith.constant 0 : i32
    %c0_i32_1 = arith.constant 0 : i32
    return %c0_i32, %c0_i32_0 : i32, i32
  }
  func.func @transform_8(%arg0: i32, %arg1: i32) -> (i32, i32) {
    %c0_i32 = arith.constant 0 : i32
    %c0_i32_0 = arith.constant 0 : i32
    %c0_i32_1 = arith.constant 0 : i32
    return %c0_i32, %c0_i32_0 : i32, i32
  }
  func.func @transform_9(%arg0: i32, %arg1: i32) -> (i32, i32) {
    %c0_i32 = arith.constant 0 : i32
    %c0_i32_0 = arith.constant 0 : i32
    %c0_i32_1 = arith.constant 0 : i32
    return %c0_i32, %c0_i32_0 : i32, i32
  }
  func.func @transform_10(%arg0: i32, %arg1: i32) -> (i32, i32) {
    %c0_i32 = arith.constant 0 : i32
    %c0_i32_0 = arith.constant 0 : i32
    %c0_i32_1 = arith.constant 0 : i32
    return %c0_i32, %c0_i32_0 : i32, i32
  }
  func.func @transform_11(%arg0: i32, %arg1: i32) -> (i32, i32) {
    %c0_i32 = arith.constant 0 : i32
    %c0_i32_0 = arith.constant 0 : i32
    %c0_i32_1 = arith.constant 0 : i32
    return %c0_i32, %c0_i32_0 : i32, i32
  }
  func.func @transform_12(%arg0: i32, %arg1: i32) -> (i32, i32, i32) {
    %c0_i32 = arith.constant 0 : i32
    %c0_i32_0 = arith.constant 0 : i32
    return %arg0, %arg1, %c0_i32 : i32, i32, i32
  }
}

</mosaic_0001>

<llo_original>
// kernel: tpu_custom_call.1
$region0: #{tpu_custom_call.1}
  #allocation0 [shape = 'u32[]', space=smem, size = 0x4, offset = 0x4, fixed_abs, tag = 'smem constant byte address 0x4 - core index']
  #allocation1 [shape = 'u32[144,128]{1,0:T(1,128)}', space=vmem, size = 0x12000, scoped, tag = 'internal scratch']
  %s0 = inlined_call_operand.vmem [shape: f32[2,8,8], index: 0, kind: input, shape index: {}]
  %s1 = inlined_call_operand.vmem [shape: f32[2,3,10,32], index: 1, kind: input, shape index: {}]
  %s2 = inlined_call_operand.vmem [shape: f32[2,3,10,32], index: 2, kind: input, shape index: {}]
  %s3 = inlined_call_operand.vmem [shape: f32[2,3,8,32], index: 3, kind: input, shape index: {}]
  %s4 = inlined_call_operand.vmem [shape: bf16[96,32], index: 4, kind: input, shape index: {}]
  %s5 = inlined_call_operand.vmem [shape: f32[1,32], index: 5, kind: input, shape index: {}]
  %s6 = inlined_call_operand.vmem [shape: bf16[96,32], index: 6, kind: input, shape index: {}]
  %s7 = inlined_call_operand.vmem [shape: f32[1,32], index: 7, kind: input, shape index: {}]
  %s8 = inlined_call_operand.vmem [shape: bf16[32,32], index: 8, kind: input, shape index: {}]
  %s9 = inlined_call_operand.vmem [shape: f32[1,32], index: 9, kind: input, shape index: {}]
  %s10 = inlined_call_operand.vmem [shape: bf16[32,32], index: 10, kind: input, shape index: {}]
  %s11 = inlined_call_operand.vmem [shape: f32[1,32], index: 11, kind: input, shape index: {}]
  %s12 = inlined_call_operand.vmem [shape: f32[2,3,256], index: 12, kind: output, shape index: {}]
  %s13 = sld [smem:[#allocation0]]
  $region81: #{tpu_custom_call.1} parent=0
    _
  %s15 = ssub.s32 1, %s13
  %s16 = scalar_select 0, %s15, %s13
  loop: start=0, step=1, limit=4
  $region2: #{tpu_custom_call.1} parent=0 // loop_pre_header
    _
  $region3: #{tpu_custom_call.1} parent=0 // loop_header
    %s18 = sphi 0, %s22
    %p19 = scmp.ge.s32.totalorder %s18, 4
    %s25 = sphi 0, %s37
    %s26 = sphi 0, %s33
    %s27 = sphi 0, %s25
    %s28 = sphi 0, %s26
    %s29 = sphi 0, %s27
    %s30 = sphi 0, %s28
    %s40 = sphi 0, %s42
    %s43 = sphi 0, %s40
    %s44 = sphi 0, %s43
    %s60 = sphi 0, %s44
    %s68 = sphi 0, %s70
    %s71 = sphi 0, %s68
    %s72 = sphi 0, %s71
    %s88 = sphi 0, %s72
    %s96 = sphi 0, %s98
    %s99 = sphi 0, %s96
    %s100 = sphi 0, %s99
    %s116 = sphi 0, %s100
    %s124 = sphi 0, %s126
    %s127 = sphi 0, %s124
    %s128 = sphi 0, %s127
    %s144 = sphi 0, %s128
    %s148 = sphi 0, %s148
    %s150 = sphi 0, %s148
    %s151 = sphi 0, %s150
    %s165 = sphi 0, %s151
    %s169 = sphi 0, %s169
    %s171 = sphi 0, %s169
    %s172 = sphi 0, %s171
    %s186 = sphi 0, %s172
    %s190 = sphi 0, %s190
    %s192 = sphi 0, %s190
    %s193 = sphi 0, %s192
    %s207 = sphi 0, %s193
    %s211 = sphi 0, %s211
    %s213 = sphi 0, %s211
    %s214 = sphi 0, %s213
    %s228 = sphi 0, %s214
    %s232 = sphi 0, %s232
    %s234 = sphi 0, %s232
    %s235 = sphi 0, %s234
    %s249 = sphi 0, %s235
    %s253 = sphi 0, %s253
    %s255 = sphi 0, %s253
    %s256 = sphi 0, %s255
    %s270 = sphi 0, %s256
    %s274 = sphi 0, %s274
    %s276 = sphi 0, %s274
    %s277 = sphi 0, %s276
    %s291 = sphi 0, %s277
    %s295 = sphi 0, %s295
    %s297 = sphi 0, %s295
    %s298 = sphi 0, %s297
    %s312 = sphi 0, %s298
    %s320 = sphi 0, %s322
    %s323 = sphi 0, %s320
    %s324 = sphi 0, %s323
    %s340 = sphi 0, %s324
  $region4: #{tpu_custom_call.1} parent=0 // loop_header_branch
    %21 = sbr.rel (%p19) target = $region8
  $region5: #{tpu_custom_call.1} parent=0 // loop_body
    %s23 = ssub.s32 %s18, 1
    %s24 = ssub.s32 %s18, 2
    %s31 = sadd.s32 1, %s26
    %p32 = scmp.ge.s32.totalorder %s31, 1
    %s33 = scalar_select %p32, 0, %s31
    %s34 = sadd.s32 1, %s25
    %s35 = scalar_select %p32, %s34, %s25
    %p36 = scmp.ge.s32.totalorder %s35, 2
    %s37 = scalar_select %p36, 0, %s35
    %s38 = ssub.s32 %s25, %s37
    %p39 = scmp.eq.s32.totalorder %s38, 0
    %s41 = sadd.s32 %s40, 1
    %s42 = scalar_select %p39, %s40, %s41
    %p45 = pneg %p39
    %p46 = scmp.eq.s32.totalorder %s18, 1
    %p47 = por %p45, %p46
    %p48 = scmp.ne.s32.totalorder %s40, %s43
    %p49 = scmp.eq.s32.totalorder %s18, 0
    %p50 = por %p48, %p49
    %p51 = scmp.ne.s32.totalorder %s40, %s43
    %p52 = scmp.eq.s32.totalorder %s23, 1
    %p53 = por %p51, %p52
    %p54 = scmp.ne.s32.totalorder %s43, %s44
    %p55 = scmp.eq.s32.totalorder %s23, 0
    %p56 = por %p54, %p55
    %p57 = scmp.ne.s32.totalorder %s43, %s44
    %p58 = scmp.eq.s32.totalorder %s24, 1
    %p59 = por %p57, %p58
    %p61 = scmp.ne.s32.totalorder %s44, %s60
    %p62 = scmp.eq.s32.totalorder %s24, 0
    %p63 = por %p61, %p62
    %s64 = ssub.s32 %s25, %s37
    %s65 = ssub.s32 %s26, %s33
    %s66 = sor.u32 %s64, %s65
    %p67 = scmp.eq.s32.totalorder %s66, 0
    %s69 = sadd.s32 %s68, 1
    %s70 = scalar_select %p67, %s68, %s69
    %p73 = pneg %p67
    %p74 = scmp.eq.s32.totalorder %s18, 1
    %p75 = por %p73, %p74
    %p76 = scmp.ne.s32.totalorder %s68, %s71
    %p77 = scmp.eq.s32.totalorder %s18, 0
    %p78 = por %p76, %p77
    %p79 = scmp.ne.s32.totalorder %s68, %s71
    %p80 = scmp.eq.s32.totalorder %s23, 1
    %p81 = por %p79, %p80
    %p82 = scmp.ne.s32.totalorder %s71, %s72
    %p83 = scmp.eq.s32.totalorder %s23, 0
    %p84 = por %p82, %p83
    %p85 = scmp.ne.s32.totalorder %s71, %s72
    %p86 = scmp.eq.s32.totalorder %s24, 1
    %p87 = por %p85, %p86
    %p89 = scmp.ne.s32.totalorder %s72, %s88
    %p90 = scmp.eq.s32.totalorder %s24, 0
    %p91 = por %p89, %p90
    %s92 = ssub.s32 %s25, %s37
    %s93 = ssub.s32 %s26, %s33
    %s94 = sor.u32 %s92, %s93
    %p95 = scmp.eq.s32.totalorder %s94, 0
    %s97 = sadd.s32 %s96, 1
    %s98 = scalar_select %p95, %s96, %s97
    %p101 = pneg %p95
    %p102 = scmp.eq.s32.totalorder %s18, 1
    %p103 = por %p101, %p102
    %p104 = scmp.ne.s32.totalorder %s96, %s99
    %p105 = scmp.eq.s32.totalorder %s18, 0
    %p106 = por %p104, %p105
    %p107 = scmp.ne.s32.totalorder %s96, %s99
    %p108 = scmp.eq.s32.totalorder %s23, 1
    %p109 = por %p107, %p108
    %p110 = scmp.ne.s32.totalorder %s99, %s100
    %p111 = scmp.eq.s32.totalorder %s23, 0
    %p112 = por %p110, %p111
    %p113 = scmp.ne.s32.totalorder %s99, %s100
    %p114 = scmp.eq.s32.totalorder %s24, 1
    %p115 = por %p113, %p114
    %p117 = scmp.ne.s32.totalorder %s100, %s116
    %p118 = scmp.eq.s32.totalorder %s24, 0
    %p119 = por %p117, %p118
    %s120 = ssub.s32 %s25, %s37
    %s121 = ssub.s32 %s26, %s33
    %s122 = sor.u32 %s120, %s121
    %p123 = scmp.eq.s32.totalorder %s122, 0
    %s125 = sadd.s32 %s124, 1
    %s126 = scalar_select %p123, %s124, %s125
    %p129 = pneg %p123
    %p130 = scmp.eq.s32.totalorder %s18, 1
    %p131 = por %p129, %p130
    %p132 = scmp.ne.s32.totalorder %s124, %s127
    %p133 = scmp.eq.s32.totalorder %s18, 0
    %p134 = por %p132, %p133
    %p135 = scmp.ne.s32.totalorder %s124, %s127
    %p136 = scmp.eq.s32.totalorder %s23, 1
    %p137 = por %p135, %p136
    %p138 = scmp.ne.s32.totalorder %s127, %s128
    %p139 = scmp.eq.s32.totalorder %s23, 0
    %p140 = por %p138, %p139
    %p141 = scmp.ne.s32.totalorder %s127, %s128
    %p142 = scmp.eq.s32.totalorder %s24, 1
    %p143 = por %p141, %p142
    %p145 = scmp.ne.s32.totalorder %s128, %s144
    %p146 = scmp.eq.s32.totalorder %s24, 0
    %p147 = por %p145, %p146
    %s149 = sadd.s32 %s148, 1
    %p152 = scmp.eq.s32.totalorder %s18, 1
    %p153 = scmp.ne.s32.totalorder %s148, %s150
    %p154 = scmp.eq.s32.totalorder %s18, 0
    %p155 = por %p153, %p154
    %p156 = scmp.ne.s32.totalorder %s148, %s150
    %p157 = scmp.eq.s32.totalorder %s23, 1
    %p158 = por %p156, %p157
    %p159 = scmp.ne.s32.totalorder %s150, %s151
    %p160 = scmp.eq.s32.totalorder %s23, 0
    %p161 = por %p159, %p160
    %p162 = scmp.ne.s32.totalorder %s150, %s151
    %p163 = scmp.eq.s32.totalorder %s24, 1
    %p164 = por %p162, %p163
    %p166 = scmp.ne.s32.totalorder %s151, %s165
    %p167 = scmp.eq.s32.totalorder %s24, 0
    %p168 = por %p166, %p167
    %s170 = sadd.s32 %s169, 1
    %p173 = scmp.eq.s32.totalorder %s18, 1
    %p174 = scmp.ne.s32.totalorder %s169, %s171
    %p175 = scmp.eq.s32.totalorder %s18, 0
    %p176 = por %p174, %p175
    %p177 = scmp.ne.s32.totalorder %s169, %s171
    %p178 = scmp.eq.s32.totalorder %s23, 1
    %p179 = por %p177, %p178
    %p180 = scmp.ne.s32.totalorder %s171, %s172
    %p181 = scmp.eq.s32.totalorder %s23, 0
    %p182 = por %p180, %p181
    %p183 = scmp.ne.s32.totalorder %s171, %s172
    %p184 = scmp.eq.s32.totalorder %s24, 1
    %p185 = por %p183, %p184
    %p187 = scmp.ne.s32.totalorder %s172, %s186
    %p188 = scmp.eq.s32.totalorder %s24, 0
    %p189 = por %p187, %p188
    %s191 = sadd.s32 %s190, 1
    %p194 = scmp.eq.s32.totalorder %s18, 1
    %p195 = scmp.ne.s32.totalorder %s190, %s192
    %p196 = scmp.eq.s32.totalorder %s18, 0
    %p197 = por %p195, %p196
    %p198 = scmp.ne.s32.totalorder %s190, %s192
    %p199 = scmp.eq.s32.totalorder %s23, 1
    %p200 = por %p198, %p199
    %p201 = scmp.ne.s32.totalorder %s192, %s193
    %p202 = scmp.eq.s32.totalorder %s23, 0
    %p203 = por %p201, %p202
    %p204 = scmp.ne.s32.totalorder %s192, %s193
    %p205 = scmp.eq.s32.totalorder %s24, 1
    %p206 = por %p204, %p205
    %p208 = scmp.ne.s32.totalorder %s193, %s207
    %p209 = scmp.eq.s32.totalorder %s24, 0
    %p210 = por %p208, %p209
    %s212 = sadd.s32 %s211, 1
    %p215 = scmp.eq.s32.totalorder %s18, 1
    %p216 = scmp.ne.s32.totalorder %s211, %s213
    %p217 = scmp.eq.s32.totalorder %s18, 0
    %p218 = por %p216, %p217
    %p219 = scmp.ne.s32.totalorder %s211, %s213
    %p220 = scmp.eq.s32.totalorder %s23, 1
    %p221 = por %p219, %p220
    %p222 = scmp.ne.s32.totalorder %s213, %s214
    %p223 = scmp.eq.s32.totalorder %s23, 0
    %p224 = por %p222, %p223
    %p225 = scmp.ne.s32.totalorder %s213, %s214
    %p226 = scmp.eq.s32.totalorder %s24, 1
    %p227 = por %p225, %p226
    %p229 = scmp.ne.s32.totalorder %s214, %s228
    %p230 = scmp.eq.s32.totalorder %s24, 0
    %p231 = por %p229, %p230
    %s233 = sadd.s32 %s232, 1
    %p236 = scmp.eq.s32.totalorder %s18, 1
    %p237 = scmp.ne.s32.totalorder %s232, %s234
    %p238 = scmp.eq.s32.totalorder %s18, 0
    %p239 = por %p237, %p238
    %p240 = scmp.ne.s32.totalorder %s232, %s234
    %p241 = scmp.eq.s32.totalorder %s23, 1
    %p242 = por %p240, %p241
    %p243 = scmp.ne.s32.totalorder %s234, %s235
    %p244 = scmp.eq.s32.totalorder %s23, 0
    %p245 = por %p243, %p244
    %p246 = scmp.ne.s32.totalorder %s234, %s235
    %p247 = scmp.eq.s32.totalorder %s24, 1
    %p248 = por %p246, %p247
    %p250 = scmp.ne.s32.totalorder %s235, %s249
    %p251 = scmp.eq.s32.totalorder %s24, 0
    %p252 = por %p250, %p251
    %s254 = sadd.s32 %s253, 1
    %p257 = scmp.eq.s32.totalorder %s18, 1
    %p258 = scmp.ne.s32.totalorder %s253, %s255
    %p259 = scmp.eq.s32.totalorder %s18, 0
    %p260 = por %p258, %p259
    %p261 = scmp.ne.s32.totalorder %s253, %s255
    %p262 = scmp.eq.s32.totalorder %s23, 1
    %p263 = por %p261, %p262
    %p264 = scmp.ne.s32.totalorder %s255, %s256
    %p265 = scmp.eq.s32.totalorder %s23, 0
    %p266 = por %p264, %p265
    %p267 = scmp.ne.s32.totalorder %s255, %s256
    %p268 = scmp.eq.s32.totalorder %s24, 1
    %p269 = por %p267, %p268
    %p271 = scmp.ne.s32.totalorder %s256, %s270
    %p272 = scmp.eq.s32.totalorder %s24, 0
    %p273 = por %p271, %p272
    %s275 = sadd.s32 %s274, 1
    %p278 = scmp.eq.s32.totalorder %s18, 1
    %p279 = scmp.ne.s32.totalorder %s274, %s276
    %p280 = scmp.eq.s32.totalorder %s18, 0
    %p281 = por %p279, %p280
    %p282 = scmp.ne.s32.totalorder %s274, %s276
    %p283 = scmp.eq.s32.totalorder %s23, 1
    %p284 = por %p282, %p283
    %p285 = scmp.ne.s32.totalorder %s276, %s277
    %p286 = scmp.eq.s32.totalorder %s23, 0
    %p287 = por %p285, %p286
    %p288 = scmp.ne.s32.totalorder %s276, %s277
    %p289 = scmp.eq.s32.totalorder %s24, 1
    %p290 = por %p288, %p289
    %p292 = scmp.ne.s32.totalorder %s277, %s291
    %p293 = scmp.eq.s32.totalorder %s24, 0
    %p294 = por %p292, %p293
    %s296 = sadd.s32 %s295, 1
    %p299 = scmp.eq.s32.totalorder %s18, 1
    %p300 = scmp.ne.s32.totalorder %s295, %s297
    %p301 = scmp.eq.s32.totalorder %s18, 0
    %p302 = por %p300, %p301
    %p303 = scmp.ne.s32.totalorder %s295, %s297
    %p304 = scmp.eq.s32.totalorder %s23, 1
    %p305 = por %p303, %p304
    %p306 = scmp.ne.s32.totalorder %s297, %s298
    %p307 = scmp.eq.s32.totalorder %s23, 0
    %p308 = por %p306, %p307
    %p309 = scmp.ne.s32.totalorder %s297, %s298
    %p310 = scmp.eq.s32.totalorder %s24, 1
    %p311 = por %p309, %p310
    %p313 = scmp.ne.s32.totalorder %s298, %s312
    %p314 = scmp.eq.s32.totalorder %s24, 0
    %p315 = por %p313, %p314
    %s316 = ssub.s32 %s25, %s37
    %s317 = ssub.s32 %s26, %s33
    %s318 = sor.u32 %s316, %s317
    %p319 = scmp.eq.s32.totalorder %s318, 0
    %s321 = sadd.s32 %s320, 1
    %s322 = scalar_select %p319, %s320, %s321
    %p325 = pneg %p319
    %p326 = scmp.eq.s32.totalorder %s18, 1
    %p327 = por %p325, %p326
    %p328 = scmp.ne.s32.totalorder %s320, %s323
    %p329 = scmp.eq.s32.totalorder %s18, 0
    %p330 = por %p328, %p329
    %p331 = scmp.ne.s32.totalorder %s320, %s323
    %p332 = scmp.eq.s32.totalorder %s23, 1
    %p333 = por %p331, %p332
    %p334 = scmp.ne.s32.totalorder %s323, %s324
    %p335 = scmp.eq.s32.totalorder %s23, 0
    %p336 = por %p334, %p335
    %p337 = scmp.ne.s32.totalorder %s323, %s324
    %p338 = scmp.eq.s32.totalorder %s24, 1
    %p339 = por %p337, %p338
    %p341 = scmp.ne.s32.totalorder %s324, %s340
    %p342 = scmp.eq.s32.totalorder %s24, 0
    %p343 = por %p341, %p342
    %p344 = scmp.le.s32.totalorder 1, %s18
    %p345 = scmp.lt.s32.totalorder %s18, 3
    %p346 = pnand %p344, %p345
    %p347 = pneg %p346
    // Predicated region
    $region9: #{tpu_custom_call.1} parent=5 // pred_check
      _
    $region10: #{tpu_custom_call.1} parent=5 // pred_check_branch
      %349 = sbr.rel (%p346) target = $region12
    $region11: #{tpu_custom_call.1} parent=5 // pred_region
      %s350 = ssub.s32 %s18, 1
      // Predicated region
      $region13: #{tpu_custom_call.1} parent=11 // pred_check
        %p351 = pneg %p161
      $region14: #{tpu_custom_call.1} parent=11 // pred_check_branch
        %353 = sbr.rel (%p351) target = $region16
      $region15: #{tpu_custom_call.1} parent=11 // pred_region
        _
      $region16: #{tpu_custom_call.1} parent=11 // pred_fallthru
        _
      // Predicated region
      $region17: #{tpu_custom_call.1} parent=11 // pred_check
        %p354 = pneg %p182
      $region18: #{tpu_custom_call.1} parent=11 // pred_check_branch
        %356 = sbr.rel (%p354) target = $region20
      $region19: #{tpu_custom_call.1} parent=11 // pred_region
        _
      $region20: #{tpu_custom_call.1} parent=11 // pred_fallthru
        _
      // Predicated region
      $region21: #{tpu_custom_call.1} parent=11 // pred_check
        %p357 = pneg %p203
      $region22: #{tpu_custom_call.1} parent=11 // pred_check_branch
        %359 = sbr.rel (%p357) target = $region24
      $region23: #{tpu_custom_call.1} parent=11 // pred_region
        _
      $region24: #{tpu_custom_call.1} parent=11 // pred_fallthru
        _
      // Predicated region
      $region25: #{tpu_custom_call.1} parent=11 // pred_check
        %p360 = pneg %p224
      $region26: #{tpu_custom_call.1} parent=11 // pred_check_branch
        %362 = sbr.rel (%p360) target = $region28
      $region27: #{tpu_custom_call.1} parent=11 // pred_region
        _
      $region28: #{tpu_custom_call.1} parent=11 // pred_fallthru
        _
      // Predicated region
      $region29: #{tpu_custom_call.1} parent=11 // pred_check
        %p363 = pneg %p245
      $region30: #{tpu_custom_call.1} parent=11 // pred_check_branch
        %365 = sbr.rel (%p363) target = $region32
      $region31: #{tpu_custom_call.1} parent=11 // pred_region
        _
      $region32: #{tpu_custom_call.1} parent=11 // pred_fallthru
        _
      // Predicated region
      $region33: #{tpu_custom_call.1} parent=11 // pred_check
        %p366 = pneg %p266
      $region34: #{tpu_custom_call.1} parent=11 // pred_check_branch
        %368 = sbr.rel (%p366) target = $region36
      $region35: #{tpu_custom_call.1} parent=11 // pred_region
        _
      $region36: #{tpu_custom_call.1} parent=11 // pred_fallthru
        _
      // Predicated region
      $region37: #{tpu_custom_call.1} parent=11 // pred_check
        %p369 = pneg %p287
      $region38: #{tpu_custom_call.1} parent=11 // pred_check_branch
        %371 = sbr.rel (%p369) target = $region40
      $region39: #{tpu_custom_call.1} parent=11 // pred_region
        _
      $region40: #{tpu_custom_call.1} parent=11 // pred_fallthru
        _
      // Predicated region
      $region41: #{tpu_custom_call.1} parent=11 // pred_check
        %p372 = pneg %p308
      $region42: #{tpu_custom_call.1} parent=11 // pred_check_branch
        %374 = sbr.rel (%p372) target = $region44
      $region43: #{tpu_custom_call.1} parent=11 // pred_region
        _
      $region44: #{tpu_custom_call.1} parent=11 // pred_fallthru
        _
    $region12: #{tpu_custom_call.1} parent=5 // pred_fallthru
      _
    %p375 = scmp.lt.s32.totalorder %s18, 2
    // Predicated region
    $region45: #{tpu_custom_call.1} parent=5 // pred_check
      %p376 = pneg %p375
    $region46: #{tpu_custom_call.1} parent=5 // pred_check_branch
      %378 = sbr.rel (%p376) target = $region48
    $region47: #{tpu_custom_call.1} parent=5 // pred_region
      // Predicated region
      $region49: #{tpu_custom_call.1} parent=47 // pred_check
        %p379 = pneg %p50
      $region50: #{tpu_custom_call.1} parent=47 // pred_check_branch
        %381 = sbr.rel (%p379) target = $region52
      $region51: #{tpu_custom_call.1} parent=47 // pred_region
        %p382 = scmp.lt.s32.totalorder %s25, 1
        %s383 = scalar_select %p382, %s25, 1
        %s384 = smul.addr %s383, 8
        %s385 = scalar_lea.vmem %s0, %s384
      $region52: #{tpu_custom_call.1} parent=47 // pred_fallthru
        _
      // Predicated region
      $region53: #{tpu_custom_call.1} parent=47 // pred_check
        %p386 = pneg %p78
      $region54: #{tpu_custom_call.1} parent=47 // pred_check_branch
        %388 = sbr.rel (%p386) target = $region56
      $region55: #{tpu_custom_call.1} parent=47 // pred_region
        %s389 = smul.u32 3, %s26
        %p390 = scmp.lt.s32.totalorder %s25, 1
        %s391 = scalar_select %p390, %s25, 1
        %p392 = scmp.lt.s32.totalorder %s389, 2
        %s393 = scalar_select %p392, %s389, 2
        %s394 = smul.addr %s393, 2
        %s395 = smul.addr %s391, 6
        %s396 = sadd.s32 %s394, %s395
        %s397 = smul.addr %s396, 8
        %s398 = scalar_lea.vmem %s1, %s397
        %s399 = smul.u32 3, %s26
      $region56: #{tpu_custom_call.1} parent=47 // pred_fallthru
        _
      // Predicated region
      $region57: #{tpu_custom_call.1} parent=47 // pred_check
        %p400 = pneg %p106
      $region58: #{tpu_custom_call.1} parent=47 // pred_check_branch
        %402 = sbr.rel (%p400) target = $region60
      $region59: #{tpu_custom_call.1} parent=47 // pred_region
        %s403 = smul.u32 3, %s26
        %p404 = scmp.lt.s32.totalorder %s25, 1
        %s405 = scalar_select %p404, %s25, 1
        %p406 = scmp.lt.s32.totalorder %s403, 2
        %s407 = scalar_select %p406, %s403, 2
        %s408 = smul.addr %s407, 2
        %s409 = smul.addr %s405, 6
        %s410 = sadd.s32 %s408, %s409
        %s411 = smul.addr %s410, 8
        %s412 = scalar_lea.vmem %s2, %s411
        %s413 = smul.u32 3, %s26
      $region60: #{tpu_custom_call.1} parent=47 // pred_fallthru
        _
      // Predicated region
      $region61: #{tpu_custom_call.1} parent=47 // pred_check
        %p414 = pneg %p134
      $region62: #{tpu_custom_call.1} parent=47 // pred_check_branch
        %416 = sbr.rel (%p414) target = $region64
      $region63: #{tpu_custom_call.1} parent=47 // pred_region
        %s417 = smul.u32 3, %s26
        %p418 = scmp.lt.s32.totalorder %s25, 1
        %s419 = scalar_select %p418, %s25, 1
        %p420 = scmp.lt.s32.totalorder %s417, 2
        %s421 = scalar_select %p420, %s417, 2
        %s422 = smul.addr %s419, 3
        %s423 = sadd.s32 %s421, %s422
        %s424 = smul.addr %s423, 8
        %s425 = scalar_lea.vmem %s3, %s424
        %s426 = smul.u32 3, %s26
      $region64: #{tpu_custom_call.1} parent=47 // pred_fallthru
        _
    $region48: #{tpu_custom_call.1} parent=5 // pred_fallthru
      _
    %p427 = scmp.le.s32.totalorder 1, %s18
    %p428 = scmp.lt.s32.totalorder %s18, 3
    %p429 = pnand %p427, %p428
    %p430 = pneg %p429
    // Predicated region
    $region65: #{tpu_custom_call.1} parent=5 // pred_check
      _
    $region66: #{tpu_custom_call.1} parent=5 // pred_check_branch
      %432 = sbr.rel (%p429) target = $region68
    $region67: #{tpu_custom_call.1} parent=5 // pred_region
      %s433 = ssub.s32 %s18, 1
      %p434 = scmp.lt.s32.totalorder %s27, 1
      %s435 = scalar_select %p434, %s27, 1
      %s436 = smul.addr %s435, 8
      %s437 = scalar_lea.vmem %s0, %s436
      %p438 = pneg %p56
      %p439 = pneg %p53
      %s440 = smul.u32 3, %s28
      %p441 = scmp.lt.s32.totalorder %s27, 1
      %s442 = scalar_select %p441, %s27, 1
      %p443 = scmp.lt.s32.totalorder %s440, 2
      %s444 = scalar_select %p443, %s440, 2
      %s445 = smul.addr %s444, 2
      %s446 = smul.addr %s442, 6
      %s447 = sadd.s32 %s445, %s446
      %s448 = smul.addr %s447, 8
      %s449 = scalar_lea.vmem %s1, %s448
      %p450 = pneg %p84
      %p451 = pneg %p81
      %s452 = smul.u32 3, %s28
      %p453 = scmp.lt.s32.totalorder %s27, 1
      %s454 = scalar_select %p453, %s27, 1
      %p455 = scmp.lt.s32.totalorder %s452, 2
      %s456 = scalar_select %p455, %s452, 2
      %s457 = smul.addr %s456, 2
      %s458 = smul.addr %s454, 6
      %s459 = sadd.s32 %s457, %s458
      %s460 = smul.addr %s459, 8
      %s461 = scalar_lea.vmem %s2, %s460
      %p462 = pneg %p112
      %p463 = pneg %p109
      %s464 = smul.u32 3, %s28
      %p465 = scmp.lt.s32.totalorder %s27, 1
      %s466 = scalar_select %p465, %s27, 1
      %p467 = scmp.lt.s32.totalorder %s464, 2
      %s468 = scalar_select %p467, %s464, 2
      %s469 = smul.addr %s466, 3
      %s470 = sadd.s32 %s468, %s469
      %s471 = smul.addr %s470, 8
      %s472 = scalar_lea.vmem %s3, %s471
      %p473 = pneg %p140
      %p474 = pneg %p137
      %p475 = pneg %p161
      %p476 = pneg %p158
      %p477 = pneg %p182
      %p478 = pneg %p179
      %p479 = pneg %p203
      %p480 = pneg %p200
      %p481 = pneg %p224
      %p482 = pneg %p221
      %p483 = pneg %p245
      %p484 = pneg %p242
      %p485 = pneg %p266
      %p486 = pneg %p263
      %p487 = pneg %p287
      %p488 = pneg %p284
      %p489 = pneg %p308
      %p490 = pneg %p305
      %p491 = pneg %p336
      %p492 = pneg %p333
      %p493 = scmp.lt.s32.totalorder %s27, 1
      %s494 = scalar_select %p493, %s27, 1
      %p495 = scmp.lt.s32.totalorder %s28, 0
      %s496 = scalar_select %p495, %s28, 0
      %s497 = smul.addr %s496, 2
      %s498 = smul.addr %s494, 2
      %s499 = sadd.s32 %s497, %s498
      %s500 = smul.addr %s499, 4
      %s501 = scalar_lea.vmem %s12, %s500
      %p502 = scmp.lt.s32.totalorder %s27, 1
      %s503 = scalar_select %p502, %s27, 1
      %s504 = smul.addr %s503, 8
      %s505 = scalar_lea.vmem %s0, %s504
      %s506 = smul.u32 3, %s28
      %p507 = scmp.lt.s32.totalorder %s27, 1
      %s508 = scalar_select %p507, %s27, 1
      %p509 = scmp.lt.s32.totalorder %s506, 2
      %s510 = scalar_select %p509, %s506, 2
      %s511 = smul.addr %s510, 2
      %s512 = smul.addr %s508, 6
      %s513 = sadd.s32 %s511, %s512
      %s514 = smul.addr %s513, 8
      %s515 = scalar_lea.vmem %s1, %s514
      %s516 = smul.u32 3, %s28
      %s517 = smul.u32 3, %s28
      %p518 = scmp.lt.s32.totalorder %s27, 1
      %s519 = scalar_select %p518, %s27, 1
      %p520 = scmp.lt.s32.totalorder %s517, 2
      %s521 = scalar_select %p520, %s517, 2
      %s522 = smul.addr %s521, 2
      %s523 = smul.addr %s519, 6
      %s524 = sadd.s32 %s522, %s523
      %s525 = smul.addr %s524, 8
      %s526 = scalar_lea.vmem %s2, %s525
      %s527 = smul.u32 3, %s28
      %s528 = smul.u32 3, %s28
      %p529 = scmp.lt.s32.totalorder %s27, 1
      %s530 = scalar_select %p529, %s27, 1
      %p531 = scmp.lt.s32.totalorder %s528, 2
      %s532 = scalar_select %p531, %s528, 2
      %s533 = smul.addr %s530, 3
      %s534 = sadd.s32 %s532, %s533
      %s535 = smul.addr %s534, 8
      %s536 = scalar_lea.vmem %s3, %s535
      %s537 = smul.u32 3, %s28
      %p538 = scmp.lt.s32.totalorder %s27, 1
      %s539 = scalar_select %p538, %s27, 1
      %p540 = scmp.lt.s32.totalorder %s28, 0
      %s541 = scalar_select %p540, %s28, 0
      %s542 = smul.addr %s541, 2
      %s543 = smul.addr %s539, 2
      %s544 = sadd.s32 %s542, %s543
      %s545 = smul.addr %s544, 4
      %s546 = scalar_lea.vmem %s12, %s545
      %v548 = vld [vmem:[%s515] sm:$0xff]
      %v549 = vld [vmem:[%s515 + $0x8] sm:$0x3]
      %v550 = vld [vmem:[%s515 + $0x10] sm:$0xff]
      %v551 = vld [vmem:[%s515 + $0x18] sm:$0x3]
      %v552 = vld [vmem:[%s515 + $0x20] sm:$0xff]
      %v553 = vld [vmem:[%s515 + $0x28] sm:$0x3]
      %vm560 = vcmask 1046528
      %v561 = vrot.slane %v548, 1
      %v562 = vrot.slane %v549, 1
      %v563 = vsel %vm560, %v561, %v562
      %v564 = vrot.slane %v550, 1
      %v565 = vrot.slane %v551, 1
      %v566 = vsel %vm560, %v564, %v565
      %v567 = vrot.slane %v552, 1
      %v568 = vrot.slane %v553, 1
      %v569 = vsel %vm560, %v567, %v568
      %570 = vrot.lane.b32.xlu0 %v563, 32
      %v571 = vpop.permute.xlu0 %570
      %572 = vrot.lane.b32.xlu0 %v566, 32
      %v573 = vpop.permute.xlu0 %572
      %574 = vrot.lane.b32.xlu0 %v569, 32
      %v575 = vpop.permute.xlu0 %574
      %vm579 = vcmask 1045504
      %v580 = vrot.slane %v548, 2
      %v581 = vrot.slane %v549, 2
      %v582 = vsel %vm579, %v580, %v581
      %v583 = vrot.slane %v550, 2
      %v584 = vrot.slane %v551, 2
      %v585 = vsel %vm579, %v583, %v584
      %v586 = vrot.slane %v552, 2
      %v587 = vrot.slane %v553, 2
      %v588 = vsel %vm579, %v586, %v587
      %589 = vrot.lane.b32.xlu0 %v582, 64
      %v590 = vpop.permute.xlu0 %589
      %591 = vrot.lane.b32.xlu0 %v585, 64
      %v592 = vpop.permute.xlu0 %591
      %593 = vrot.lane.b32.xlu0 %v588, 64
      %v594 = vpop.permute.xlu0 %593
      %vm598 = vcmask 261120
      %v599 = vsel %vm598, %v548, %v571
      %v600 = vsel %vm598, %v550, %v573
      %v601 = vsel %vm598, %v552, %v575
      %vm602 = vcmask 523264
      %v603 = vsel %vm602, %v599, %v590
      %v604 = vsel %vm602, %v600, %v592
      %v605 = vsel %vm602, %v601, %v594
      %v606 = vpack.c.bf16 %v604, %v603
      %v607 = vpack.c.bf16 %v605, %v605
      %v608 = vld [vmem:[%s4] sm:$0xf]
      %v609 = vld [vmem:[%s4 + $0x4] sm:$0xf]
      %v610 = vld [vmem:[%s4 + $0x8] sm:$0xf]
      %v611 = vld [vmem:[%s4 + $0xc] sm:$0xf]
      %v612 = vld [vmem:[%s4 + $0x10] sm:$0xf]
      %v613 = vld [vmem:[%s4 + $0x14] sm:$0xf]
      %v614 = vld [vmem:[%s4 + $0x18] sm:$0xf]
      %v615 = vld [vmem:[%s4 + $0x1c] sm:$0xf]
      %v616 = vld [vmem:[%s4 + $0x20] sm:$0xf]
      %v617 = vld [vmem:[%s4 + $0x24] sm:$0xf]
      %v618 = vld [vmem:[%s4 + $0x28] sm:$0xf]
      %v619 = vld [vmem:[%s4 + $0x2c] sm:$0xf]
      %v620 = vld [vmem:[%s5] sm:$0x1]
      %v622 = vlaneseq
      %v623 = vshrl.u32 %v622, 7
      %v624 = vsub.s32 0, %v623
      %v625 = vrot.slane %v620, %v624
      %v639 = vunpack.c.l.b16 %v608
      %v640 = vunpack.c.l.b16 %v609
      %v641 = vunpack.c.l.b16 %v610
      %v642 = vunpack.c.l.b16 %v611
      %v643 = vunpack.c.l.b16 %v612
      %v644 = vunpack.c.l.b16 %v613
      %v645 = vunpack.c.l.b16 %v614
      %v646 = vunpack.c.l.b16 %v615
      %v647 = vunpack.c.l.b16 %v616
      %v648 = vunpack.c.l.b16 %v617
      %v649 = vunpack.c.l.b16 %v618
      %v650 = vunpack.c.l.b16 %v619
      %v651 = vpack.c.b16 %v640, %v639
      %v652 = vpack.c.b16 %v642, %v641
      %v653 = vpack.c.b16 %v644, %v643
      %v654 = vpack.c.b16 %v646, %v645
      %v655 = vpack.c.b16 %v648, %v647
      %v656 = vpack.c.b16 %v650, %v649
      %vm663 = vcmask 785408
      %v665 = vsel %vm663, %v606, 0
      %v668 = vsel %vm663, %v607, 0
      %670 = vmatprep.subr.bf16.mxu0 0
      %671 = vmatpush1.bf16.msra.mxu0 %v651
      %672 = vmatprep.subr.bf16.mxu0 0
      %673 = vmatpush1.bf16.msra.mxu0 %v652
      %674 = vmatprep.subr.bf16.mxu0 0
      %675 = vmatpush1.bf16.msra.mxu0 %v653
      %676 = vmatprep.subr.bf16.mxu0 0
      %677 = vmatpush1.bf16.msra.mxu0 %v654
      %678 = vmatprep.subr.bf16.mxu0 0
      %679 = vmatpush1.bf16.msra.mxu0 %v655
      %680 = vmatprep.subr.bf16.mxu0 0
      %681 = vmatpush1.bf16.msra.mxu0 %v656
      %682 = vmatprep.subr.bf16.mxu0 0
      %683 = vmatpush1.bf16.msra.mxu0 0
      %684 = vmatprep.subr.bf16.mxu0 0
      %685 = vmatpush1.bf16.msra.mxu0 0
      %686 = vmatprep.subr.bf16.mxu0 0
      %687 = vmatpush1.bf16.msra.mxu0 0
      %688 = vmatprep.subr.bf16.mxu0 0
      %689 = vmatpush1.bf16.msra.mxu0 0
      %690 = vmatprep.subr.bf16.mxu0 0
      %691 = vmatpush1.bf16.msra.mxu0 0
      %692 = vmatprep.subr.bf16.mxu0 0
      %693 = vmatpush1.bf16.msra.mxu0 0
      %694 = vmatprep.subr.bf16.mxu0 0
      %695 = vmatpush1.bf16.msra.mxu0 0
      %696 = vmatprep.subr.bf16.mxu0 0
      %697 = vmatpush1.bf16.msra.mxu0 0
      %698 = vmatprep.subr.bf16.mxu0 0
      %699 = vmatpush1.bf16.msra.mxu0 0
      %700 = vmatprep.subr.bf16.mxu0 0
      %701 = vmatpush1.bf16.msra.mxu0 0
      %702 = vmatprep.mubr.bf16.mxu0 0
      %703 = vmatmul.mubr.bf16.gmra.mrb[0].mxu0 %v665
      %v704 = vpop.f32.mrb[0].mxu0
      %v705 = vadd.f32 %v625, %v704
      %v706 = vpop.f32.mrb[0].mxu0
      %v707 = vpop.f32.mrb[0].mxu0
      %v708 = vadd.f32 %v625, %v707
      %v709 = vpop.f32.mrb[0].mxu0
      %710 = vmatprep.mubr.bf16.mxu0 0
      %711 = vmatmul.mubr.bf16.gmra.mrb[0].mxu0 %v668
      %v712 = vpop.f32.mrb[0].mxu0
      %v713 = vadd.f32 %v625, %v712
      %v714 = vpop.f32.mrb[0].mxu0
      %v715 = vpop.f32.mrb[0].mxu0
      %v716 = vpop.f32.mrb[0].mxu0
      %717 = vdwg.mxu0
      %v718 = vld [vmem:[%s526] sm:$0xff]
      %v719 = vld [vmem:[%s526 + $0x8] sm:$0x3]
      %v720 = vld [vmem:[%s526 + $0x10] sm:$0xff]
      %v721 = vld [vmem:[%s526 + $0x18] sm:$0x3]
      %v722 = vld [vmem:[%s526 + $0x20] sm:$0xff]
      %v723 = vld [vmem:[%s526 + $0x28] sm:$0x3]
      %v730 = vrot.slane %v718, 1
      %v731 = vrot.slane %v719, 1
      %v732 = vsel %vm560, %v730, %v731
      %v733 = vrot.slane %v720, 1
      %v734 = vrot.slane %v721, 1
      %v735 = vsel %vm560, %v733, %v734
      %v736 = vrot.slane %v722, 1
      %v737 = vrot.slane %v723, 1
      %v738 = vsel %vm560, %v736, %v737
      %739 = vrot.lane.b32.xlu0 %v732, 32
      %v740 = vpop.permute.xlu0 %739
      %741 = vrot.lane.b32.xlu0 %v735, 32
      %v742 = vpop.permute.xlu0 %741
      %743 = vrot.lane.b32.xlu0 %v738, 32
      %v744 = vpop.permute.xlu0 %743
      %v748 = vrot.slane %v718, 2
      %v749 = vrot.slane %v719, 2
      %v750 = vsel %vm579, %v748, %v749
      %v751 = vrot.slane %v720, 2
      %v752 = vrot.slane %v721, 2
      %v753 = vsel %vm579, %v751, %v752
      %v754 = vrot.slane %v722, 2
      %v755 = vrot.slane %v723, 2
      %v756 = vsel %vm579, %v754, %v755
      %757 = vrot.lane.b32.xlu0 %v750, 64
      %v758 = vpop.permute.xlu0 %757
      %759 = vrot.lane.b32.xlu0 %v753, 64
      %v760 = vpop.permute.xlu0 %759
      %761 = vrot.lane.b32.xlu0 %v756, 64
      %v762 = vpop.permute.xlu0 %761
      %v766 = vsel %vm598, %v718, %v740
      %v767 = vsel %vm598, %v720, %v742
      %v768 = vsel %vm598, %v722, %v744
      %v769 = vsel %vm602, %v766, %v758
      %v770 = vsel %vm602, %v767, %v760
      %v771 = vsel %vm602, %v768, %v762
      %v772 = vpack.c.bf16 %v770, %v769
      %v773 = vpack.c.bf16 %v771, %v771
      %v774 = vld [vmem:[%s6] sm:$0xf]
      %v775 = vld [vmem:[%s6 + $0x4] sm:$0xf]
      %v776 = vld [vmem:[%s6 + $0x8] sm:$0xf]
      %v777 = vld [vmem:[%s6 + $0xc] sm:$0xf]
      %v778 = vld [vmem:[%s6 + $0x10] sm:$0xf]
      %v779 = vld [vmem:[%s6 + $0x14] sm:$0xf]
      %v780 = vld [vmem:[%s6 + $0x18] sm:$0xf]
      %v781 = vld [vmem:[%s6 + $0x1c] sm:$0xf]
      %v782 = vld [vmem:[%s6 + $0x20] sm:$0xf]
      %v783 = vld [vmem:[%s6 + $0x24] sm:$0xf]
      %v784 = vld [vmem:[%s6 + $0x28] sm:$0xf]
      %v785 = vld [vmem:[%s6 + $0x2c] sm:$0xf]
      %v786 = vld [vmem:[%s7] sm:$0x1]
      %v788 = vlaneseq
      %v789 = vshrl.u32 %v788, 7
      %v790 = vsub.s32 0, %v789
      %v791 = vrot.slane %v786, %v790
      %v805 = vunpack.c.l.b16 %v774
      %v806 = vunpack.c.l.b16 %v775
      %v807 = vunpack.c.l.b16 %v776
      %v808 = vunpack.c.l.b16 %v777
      %v809 = vunpack.c.l.b16 %v778
      %v810 = vunpack.c.l.b16 %v779
      %v811 = vunpack.c.l.b16 %v780
      %v812 = vunpack.c.l.b16 %v781
      %v813 = vunpack.c.l.b16 %v782
      %v814 = vunpack.c.l.b16 %v783
      %v815 = vunpack.c.l.b16 %v784
      %v816 = vunpack.c.l.b16 %v785
      %v817 = vpack.c.b16 %v806, %v805
      %v818 = vpack.c.b16 %v808, %v807
      %v819 = vpack.c.b16 %v810, %v809
      %v820 = vpack.c.b16 %v812, %v811
      %v821 = vpack.c.b16 %v814, %v813
      %v822 = vpack.c.b16 %v816, %v815
      %v830 = vsel %vm663, %v772, 0
      %v833 = vsel %vm663, %v773, 0
      %835 = vmatprep.subr.bf16.mxu0 0
      %836 = vmatpush1.bf16.msra.mxu0 %v817
      %837 = vmatprep.subr.bf16.mxu0 0
      %838 = vmatpush1.bf16.msra.mxu0 %v818
      %839 = vmatprep.subr.bf16.mxu0 0
      %840 = vmatpush1.bf16.msra.mxu0 %v819
      %841 = vmatprep.subr.bf16.mxu0 0
      %842 = vmatpush1.bf16.msra.mxu0 %v820
      %843 = vmatprep.subr.bf16.mxu0 0
      %844 = vmatpush1.bf16.msra.mxu0 %v821
      %845 = vmatprep.subr.bf16.mxu0 0
      %846 = vmatpush1.bf16.msra.mxu0 %v822
      %847 = vmatprep.subr.bf16.mxu0 0
      %848 = vmatpush1.bf16.msra.mxu0 0
      %849 = vmatprep.subr.bf16.mxu0 0
      %850 = vmatpush1.bf16.msra.mxu0 0
      %851 = vmatprep.subr.bf16.mxu0 0
      %852 = vmatpush1.bf16.msra.mxu0 0
      %853 = vmatprep.subr.bf16.mxu0 0
      %854 = vmatpush1.bf16.msra.mxu0 0
      %855 = vmatprep.subr.bf16.mxu0 0
      %856 = vmatpush1.bf16.msra.mxu0 0
      %857 = vmatprep.subr.bf16.mxu0 0
      %858 = vmatpush1.bf16.msra.mxu0 0
      %859 = vmatprep.subr.bf16.mxu0 0
      %860 = vmatpush1.bf16.msra.mxu0 0
      %861 = vmatprep.subr.bf16.mxu0 0
      %862 = vmatpush1.bf16.msra.mxu0 0
      %863 = vmatprep.subr.bf16.mxu0 0
      %864 = vmatpush1.bf16.msra.mxu0 0
      %865 = vmatprep.subr.bf16.mxu0 0
      %866 = vmatpush1.bf16.msra.mxu0 0
      %867 = vmatprep.mubr.bf16.mxu0 0
      %868 = vmatmul.mubr.bf16.gmra.mrb[0].mxu0 %v830
      %v869 = vpop.f32.mrb[0].mxu0
      %v870 = vadd.f32 %v791, %v869
      %v871 = vpop.f32.mrb[0].mxu0
      %v872 = vpop.f32.mrb[0].mxu0
      %v873 = vadd.f32 %v791, %v872
      %v874 = vpop.f32.mrb[0].mxu0
      %875 = vmatprep.mubr.bf16.mxu0 0
      %876 = vmatmul.mubr.bf16.gmra.mrb[0].mxu0 %v833
      %v877 = vpop.f32.mrb[0].mxu0
      %v878 = vadd.f32 %v791, %v877
      %v879 = vpop.f32.mrb[0].mxu0
      %v880 = vpop.f32.mrb[0].mxu0
      %v881 = vpop.f32.mrb[0].mxu0
      %882 = vdwg.mxu0
      %v883 = vld [vmem:[%s536] sm:$0xff]
      %v884 = vld [vmem:[%s536 + $0x8] sm:$0xff]
      %v885 = vld [vmem:[%s536 + $0x10] sm:$0xff]
      %v886 = vpack.c.bf16 %v884, %v883
      %v887 = vpack.c.bf16 %v885, %v885
      %v888 = vld [vmem:[%s8] sm:$0xf]
      %v889 = vld [vmem:[%s8 + $0x4] sm:$0xf]
      %v890 = vld [vmem:[%s8 + $0x8] sm:$0xf]
      %v891 = vld [vmem:[%s8 + $0xc] sm:$0xf]
      %v892 = vld [vmem:[%s9] sm:$0x1]
      %v894 = vlaneseq
      %v895 = vshrl.u32 %v894, 7
      %v896 = vsub.s32 0, %v895
      %v897 = vrot.slane %v892, %v896
      %v903 = vunpack.c.l.b16 %v888
      %v904 = vunpack.c.l.b16 %v889
      %v905 = vunpack.c.l.b16 %v890
      %v906 = vunpack.c.l.b16 %v891
      %v907 = vpack.c.b16 %v904, %v903
      %v908 = vpack.c.b16 %v906, %v905
      %v912 = vsel %vm598, %v886, 0
      %v915 = vsel %vm598, %v887, 0
      %917 = vmatprep.subr.bf16.mxu0 0
      %918 = vmatpush1.bf16.msra.mxu0 %v907
      %919 = vmatprep.subr.bf16.mxu0 0
      %920 = vmatpush1.bf16.msra.mxu0 %v908
      %921 = vmatprep.subr.bf16.mxu0 0
      %922 = vmatpush1.bf16.msra.mxu0 0
      %923 = vmatprep.subr.bf16.mxu0 0
      %924 = vmatpush1.bf16.msra.mxu0 0
      %925 = vmatprep.subr.bf16.mxu0 0
      %926 = vmatpush1.bf16.msra.mxu0 0
      %927 = vmatprep.subr.bf16.mxu0 0
      %928 = vmatpush1.bf16.msra.mxu0 0
      %929 = vmatprep.subr.bf16.mxu0 0
      %930 = vmatpush1.bf16.msra.mxu0 0
      %931 = vmatprep.subr.bf16.mxu0 0
      %932 = vmatpush1.bf16.msra.mxu0 0
      %933 = vmatprep.subr.bf16.mxu0 0
      %934 = vmatpush1.bf16.msra.mxu0 0
      %935 = vmatprep.subr.bf16.mxu0 0
      %936 = vmatpush1.bf16.msra.mxu0 0
      %937 = vmatprep.subr.bf16.mxu0 0
      %938 = vmatpush1.bf16.msra.mxu0 0
      %939 = vmatprep.subr.bf16.mxu0 0
      %940 = vmatpush1.bf16.msra.mxu0 0
      %941 = vmatprep.subr.bf16.mxu0 0
      %942 = vmatpush1.bf16.msra.mxu0 0
      %943 = vmatprep.subr.bf16.mxu0 0
      %944 = vmatpush1.bf16.msra.mxu0 0
      %945 = vmatprep.subr.bf16.mxu0 0
      %946 = vmatpush1.bf16.msra.mxu0 0
      %947 = vmatprep.subr.bf16.mxu0 0
      %948 = vmatpush1.bf16.msra.mxu0 0
      %949 = vmatprep.mubr.bf16.mxu0 0
      %950 = vmatmul.mubr.bf16.gmra.mrb[0].mxu0 %v912
      %v951 = vpop.f32.mrb[0].mxu0
      %v952 = vadd.f32 %v897, %v951
      %v953 = vpop.f32.mrb[0].mxu0
      %v954 = vpop.f32.mrb[0].mxu0
      %v955 = vadd.f32 %v897, %v954
      %v956 = vpop.f32.mrb[0].mxu0
      %957 = vmatprep.mubr.bf16.mxu0 0
      %958 = vmatmul.mubr.bf16.gmra.mrb[0].mxu0 %v915
      %v959 = vpop.f32.mrb[0].mxu0
      %v960 = vadd.f32 %v897, %v959
      %v961 = vpop.f32.mrb[0].mxu0
      %v962 = vpop.f32.mrb[0].mxu0
      %v963 = vpop.f32.mrb[0].mxu0
      %964 = vdwg.mxu0
      %968 = vrot.lane.b32.xlu0 %v705, 120
      %v969 = vpop.permute.xlu0 %968
      %970 = vrot.lane.b32.xlu0 %v708, 120
      %v971 = vpop.permute.xlu0 %970
      %972 = vrot.lane.b32.xlu0 %v713, 120
      %v973 = vpop.permute.xlu0 %972
      %977 = vrot.lane.b32.xlu0 %v705, 112
      %v978 = vpop.permute.xlu0 %977
      %979 = vrot.lane.b32.xlu0 %v708, 112
      %v980 = vpop.permute.xlu0 %979
      %981 = vrot.lane.b32.xlu0 %v713, 112
      %v982 = vpop.permute.xlu0 %981
      %986 = vrot.lane.b32.xlu0 %v705, 104
      %v987 = vpop.permute.xlu0 %986
      %988 = vrot.lane.b32.xlu0 %v708, 104
      %v989 = vpop.permute.xlu0 %988
      %990 = vrot.lane.b32.xlu0 %v713, 104
      %v991 = vpop.permute.xlu0 %990
      %v995 = vpack.c.bf16 %v705, %v705
      %v996 = vpack.c.bf16 %v708, %v708
      %v997 = vpack.c.bf16 %v713, %v713
      %v998 = vpack.c.bf16 %v969, %v969
      %v999 = vpack.c.bf16 %v971, %v971
      %v1000 = vpack.c.bf16 %v973, %v973
      %v1001 = vpack.c.bf16 %v978, %v978
      %v1002 = vpack.c.bf16 %v980, %v980
      %v1003 = vpack.c.bf16 %v982, %v982
      %v1004 = vpack.c.bf16 %v987, %v987
      %v1005 = vpack.c.bf16 %v989, %v989
      %v1006 = vpack.c.bf16 %v991, %v991
      %1010 = vrot.lane.b32.xlu0 %v870, 120
      %v1011 = vpop.permute.xlu0 %1010
      %1012 = vrot.lane.b32.xlu0 %v873, 120
      %v1013 = vpop.permute.xlu0 %1012
      %1014 = vrot.lane.b32.xlu0 %v878, 120
      %v1015 = vpop.permute.xlu0 %1014
      %1019 = vrot.lane.b32.xlu0 %v870, 112
      %v1020 = vpop.permute.xlu0 %1019
      %1021 = vrot.lane.b32.xlu0 %v873, 112
      %v1022 = vpop.permute.xlu0 %1021
      %1023 = vrot.lane.b32.xlu0 %v878, 112
      %v1024 = vpop.permute.xlu0 %1023
      %1028 = vrot.lane.b32.xlu0 %v870, 104
      %v1029 = vpop.permute.xlu0 %1028
      %1030 = vrot.lane.b32.xlu0 %v873, 104
      %v1031 = vpop.permute.xlu0 %1030
      %1032 = vrot.lane.b32.xlu0 %v878, 104
      %v1033 = vpop.permute.xlu0 %1032
      %v1037 = vpack.c.bf16 %v870, %v870
      %v1038 = vpack.c.bf16 %v873, %v873
      %v1039 = vpack.c.bf16 %v878, %v878
      %v1040 = vpack.c.bf16 %v1011, %v1011
      %v1041 = vpack.c.bf16 %v1013, %v1013
      %v1042 = vpack.c.bf16 %v1015, %v1015
      %v1043 = vpack.c.bf16 %v1020, %v1020
      %v1044 = vpack.c.bf16 %v1022, %v1022
      %v1045 = vpack.c.bf16 %v1024, %v1024
      %v1046 = vpack.c.bf16 %v1029, %v1029
      %v1047 = vpack.c.bf16 %v1031, %v1031
      %v1048 = vpack.c.bf16 %v1033, %v1033
      %1052 = vrot.lane.b32.xlu0 %v952, 120
      %v1053 = vpop.permute.xlu0 %1052
      %1054 = vrot.lane.b32.xlu0 %v955, 120
      %v1055 = vpop.permute.xlu0 %1054
      %1056 = vrot.lane.b32.xlu0 %v960, 120
      %v1057 = vpop.permute.xlu0 %1056
      %1061 = vrot.lane.b32.xlu0 %v952, 112
      %v1062 = vpop.permute.xlu0 %1061
      %1063 = vrot.lane.b32.xlu0 %v955, 112
      %v1064 = vpop.permute.xlu0 %1063
      %1065 = vrot.lane.b32.xlu0 %v960, 112
      %v1066 = vpop.permute.xlu0 %1065
      %1070 = vrot.lane.b32.xlu0 %v952, 104
      %v1071 = vpop.permute.xlu0 %1070
      %1072 = vrot.lane.b32.xlu0 %v955, 104
      %v1073 = vpop.permute.xlu0 %1072
      %1074 = vrot.lane.b32.xlu0 %v960, 104
      %v1075 = vpop.permute.xlu0 %1074
      %v1079 = vpack.c.bf16 %v952, %v952
      %v1080 = vpack.c.bf16 %v955, %v955
      %v1081 = vpack.c.bf16 %v960, %v960
      %v1082 = vpack.c.bf16 %v1053, %v1053
      %v1083 = vpack.c.bf16 %v1055, %v1055
      %v1084 = vpack.c.bf16 %v1057, %v1057
      %v1085 = vpack.c.bf16 %v1062, %v1062
      %v1086 = vpack.c.bf16 %v1064, %v1064
      %v1087 = vpack.c.bf16 %v1066, %v1066
      %v1088 = vpack.c.bf16 %v1071, %v1071
      %v1089 = vpack.c.bf16 %v1073, %v1073
      %v1090 = vpack.c.bf16 %v1075, %v1075
      %v1091 = vld [vmem:[%s505] sm:$0xff]
      %vm1092 = vcmask 64512
      %v1094 = vsel %vm1092, %v995, 0
      %v1097 = vsel %vm1092, %v1037, 0
      %1099 = vmatprep.subr.bf16.mxu0 0
      %1100 = vmatpush1.bf16.xpose.msra.mxu0 %v1097
      %1101 = vmatprep.subr.bf16.mxu0 0
      %1102 = vmatpush1.bf16.xpose.msra.mxu0 0
      %1103 = vmatprep.subr.bf16.mxu0 0
      %1104 = vmatpush1.bf16.xpose.msra.mxu0 0
      %1105 = vmatprep.subr.bf16.mxu0 0
      %1106 = vmatpush1.bf16.xpose.msra.mxu0 0
      %1107 = vmatprep.subr.bf16.mxu0 0
      %1108 = vmatpush1.bf16.xpose.msra.mxu0 0
      %1109 = vmatprep.subr.bf16.mxu0 0
      %1110 = vmatpush1.bf16.xpose.msra.mxu0 0
      %1111 = vmatprep.subr.bf16.mxu0 0
      %1112 = vmatpush1.bf16.xpose.msra.mxu0 0
      %1113 = vmatprep.subr.bf16.mxu0 0
      %1114 = vmatpush1.bf16.xpose.msra.mxu0 0
      %1115 = vmatprep.subr.bf16.mxu0 0
      %1116 = vmatpush1.bf16.xpose.msra.mxu0 0
      %1117 = vmatprep.subr.bf16.mxu0 0
      %1118 = vmatpush1.bf16.xpose.msra.mxu0 0
      %1119 = vmatprep.subr.bf16.mxu0 0
      %1120 = vmatpush1.bf16.xpose.msra.mxu0 0
      %1121 = vmatprep.subr.bf16.mxu0 0
      %1122 = vmatpush1.bf16.xpose.msra.mxu0 0
      %1123 = vmatprep.subr.bf16.mxu0 0
      %1124 = vmatpush1.bf16.xpose.msra.mxu0 0
      %1125 = vmatprep.subr.bf16.mxu0 0
      %1126 = vmatpush1.bf16.xpose.msra.mxu0 0
      %1127 = vmatprep.subr.bf16.mxu0 0
      %1128 = vmatpush1.bf16.xpose.msra.mxu0 0
      %1129 = vmatprep.subr.bf16.mxu0 0
      %1130 = vmatpush1.bf16.xpose.msra.mxu0 0
      %1131 = vmatprep.mubr.bf16.mxu0 0
      %1132 = vmatmul.mubr.bf16.gmra.mrb[0].mxu0 %v1094
      %v1133 = vpop.f32.mrb[0].mxu0
      %v1134 = vadd.f32 0.0, %v1133
      %v1135 = vpop.f32.mrb[0].mxu0
      %v1136 = vpop.f32.mrb[0].mxu0
      %v1137 = vpop.f32.mrb[0].mxu0
      %1138 = vdwg.mxu0
      %v1140 = vsel %vm1092, %v996, 0
      %v1143 = vsel %vm1092, %v1038, 0
      %1145 = vmatprep.subr.bf16.mxu0 0
      %1146 = vmatpush1.bf16.xpose.msra.mxu0 %v1143
      %1147 = vmatprep.subr.bf16.mxu0 0
      %1148 = vmatpush1.bf16.xpose.msra.mxu0 0
      %1149 = vmatprep.subr.bf16.mxu0 0
      %1150 = vmatpush1.bf16.xpose.msra.mxu0 0
      %1151 = vmatprep.subr.bf16.mxu0 0
      %1152 = vmatpush1.bf16.xpose.msra.mxu0 0
      %1153 = vmatprep.subr.bf16.mxu0 0
      %1154 = vmatpush1.bf16.xpose.msra.mxu0 0
      %1155 = vmatprep.subr.bf16.mxu0 0
      %1156 = vmatpush1.bf16.xpose.msra.mxu0 0
      %1157 = vmatprep.subr.bf16.mxu0 0
      %1158 = vmatpush1.bf16.xpose.msra.mxu0 0
      %1159 = vmatprep.subr.bf16.mxu0 0
      %1160 = vmatpush1.bf16.xpose.msra.mxu0 0
      %1161 = vmatprep.subr.bf16.mxu0 0
      %1162 = vmatpush1.bf16.xpose.msra.mxu0 0
      %1163 = vmatprep.subr.bf16.mxu0 0
      %1164 = vmatpush1.bf16.xpose.msra.mxu0 0
      %1165 = vmatprep.subr.bf16.mxu0 0
      %1166 = vmatpush1.bf16.xpose.msra.mxu0 0
      %1167 = vmatprep.subr.bf16.mxu0 0
      %1168 = vmatpush1.bf16.xpose.msra.mxu0 0
      %1169 = vmatprep.subr.bf16.mxu0 0
      %1170 = vmatpush1.bf16.xpose.msra.mxu0 0
      %1171 = vmatprep.subr.bf16.mxu0 0
      %1172 = vmatpush1.bf16.xpose.msra.mxu0 0
      %1173 = vmatprep.subr.bf16.mxu0 0
      %1174 = vmatpush1.bf16.xpose.msra.mxu0 0
      %1175 = vmatprep.subr.bf16.mxu0 0
      %1176 = vmatpush1.bf16.xpose.msra.mxu0 0
      %1177 = vmatprep.mubr.bf16.mxu0 0
      %1178 = vmatmul.mubr.bf16.gmra.mrb[0].mxu0 %v1140
      %v1179 = vpop.f32.mrb[0].mxu0
      %v1180 = vadd.f32 0.0, %v1179
      %v1181 = vpop.f32.mrb[0].mxu0
      %v1182 = vpop.f32.mrb[0].mxu0
      %v1183 = vpop.f32.mrb[0].mxu0
      %1184 = vdwg.mxu0
      %v1186 = vsel %vm1092, %v997, 0
      %v1189 = vsel %vm1092, %v1039, 0
      %1191 = vmatprep.subr.bf16.mxu0 0
      %1192 = vmatpush1.bf16.xpose.msra.mxu0 %v1189
      %1193 = vmatprep.subr.bf16.mxu0 0
      %1194 = vmatpush1.bf16.xpose.msra.mxu0 0
      %1195 = vmatprep.subr.bf16.mxu0 0
      %1196 = vmatpush1.bf16.xpose.msra.mxu0 0
      %1197 = vmatprep.subr.bf16.mxu0 0
      %1198 = vmatpush1.bf16.xpose.msra.mxu0 0
      %1199 = vmatprep.subr.bf16.mxu0 0
      %1200 = vmatpush1.bf16.xpose.msra.mxu0 0
      %1201 = vmatprep.subr.bf16.mxu0 0
      %1202 = vmatpush1.bf16.xpose.msra.mxu0 0
      %1203 = vmatprep.subr.bf16.mxu0 0
      %1204 = vmatpush1.bf16.xpose.msra.mxu0 0
      %1205 = vmatprep.subr.bf16.mxu0 0
      %1206 = vmatpush1.bf16.xpose.msra.mxu0 0
      %1207 = vmatprep.subr.bf16.mxu0 0
      %1208 = vmatpush1.bf16.xpose.msra.mxu0 0
      %1209 = vmatprep.subr.bf16.mxu0 0
      %1210 = vmatpush1.bf16.xpose.msra.mxu0 0
      %1211 = vmatprep.subr.bf16.mxu0 0
      %1212 = vmatpush1.bf16.xpose.msra.mxu0 0
      %1213 = vmatprep.subr.bf16.mxu0 0
      %1214 = vmatpush1.bf16.xpose.msra.mxu0 0
      %1215 = vmatprep.subr.bf16.mxu0 0
      %1216 = vmatpush1.bf16.xpose.msra.mxu0 0
      %1217 = vmatprep.subr.bf16.mxu0 0
      %1218 = vmatpush1.bf16.xpose.msra.mxu0 0
      %1219 = vmatprep.subr.bf16.mxu0 0
      %1220 = vmatpush1.bf16.xpose.msra.mxu0 0
      %1221 = vmatprep.subr.bf16.mxu0 0
      %1222 = vmatpush1.bf16.xpose.msra.mxu0 0
      %1223 = vmatprep.mubr.bf16.mxu0 0
      %1224 = vmatmul.mubr.bf16.gmra.mrb[0].mxu0 %v1186
      %v1225 = vpop.f32.mrb[0].mxu0
      %v1226 = vadd.f32 0.0, %v1225
      %v1227 = vpop.f32.mrb[0].mxu0
      %v1228 = vpop.f32.mrb[0].mxu0
      %v1229 = vpop.f32.mrb[0].mxu0
      %1230 = vdwg.mxu0
      %v1232 = vsel %vm1092, %v998, 0
      %v1235 = vsel %vm1092, %v1040, 0
      %1237 = vmatprep.subr.bf16.mxu0 0
      %1238 = vmatpush1.bf16.xpose.msra.mxu0 %v1235
      %1239 = vmatprep.subr.bf16.mxu0 0
      %1240 = vmatpush1.bf16.xpose.msra.mxu0 0
      %1241 = vmatprep.subr.bf16.mxu0 0
      %1242 = vmatpush1.bf16.xpose.msra.mxu0 0
      %1243 = vmatprep.subr.bf16.mxu0 0
      %1244 = vmatpush1.bf16.xpose.msra.mxu0 0
      %1245 = vmatprep.subr.bf16.mxu0 0
      %1246 = vmatpush1.bf16.xpose.msra.mxu0 0
      %1247 = vmatprep.subr.bf16.mxu0 0
      %1248 = vmatpush1.bf16.xpose.msra.mxu0 0
      %1249 = vmatprep.subr.bf16.mxu0 0
      %1250 = vmatpush1.bf16.xpose.msra.mxu0 0
      %1251 = vmatprep.subr.bf16.mxu0 0
      %1252 = vmatpush1.bf16.xpose.msra.mxu0 0
      %1253 = vmatprep.subr.bf16.mxu0 0
      %1254 = vmatpush1.bf16.xpose.msra.mxu0 0
      %1255 = vmatprep.subr.bf16.mxu0 0
      %1256 = vmatpush1.bf16.xpose.msra.mxu0 0
      %1257 = vmatprep.subr.bf16.mxu0 0
      %1258 = vmatpush1.bf16.xpose.msra.mxu0 0
      %1259 = vmatprep.subr.bf16.mxu0 0
      %1260 = vmatpush1.bf16.xpose.msra.mxu0 0
      %1261 = vmatprep.subr.bf16.mxu0 0
      %1262 = vmatpush1.bf16.xpose.msra.mxu0 0
      %1263 = vmatprep.subr.bf16.mxu0 0
      %1264 = vmatpush1.bf16.xpose.msra.mxu0 0
      %1265 = vmatprep.subr.bf16.mxu0 0
      %1266 = vmatpush1.bf16.xpose.msra.mxu0 0
      %1267 = vmatprep.subr.bf16.mxu0 0
      %1268 = vmatpush1.bf16.xpose.msra.mxu0 0
      %1269 = vmatprep.mubr.bf16.mxu0 0
      %1270 = vmatmul.mubr.bf16.gmra.mrb[0].mxu0 %v1232
      %v1271 = vpop.f32.mrb[0].mxu0
      %v1272 = vadd.f32 0.0, %v1271
      %v1273 = vpop.f32.mrb[0].mxu0
      %v1274 = vpop.f32.mrb[0].mxu0
      %v1275 = vpop.f32.mrb[0].mxu0
      %1276 = vdwg.mxu0
      %v1278 = vsel %vm1092, %v999, 0
      %v1281 = vsel %vm1092, %v1041, 0
      %1283 = vmatprep.subr.bf16.mxu0 0
      %1284 = vmatpush1.bf16.xpose.msra.mxu0 %v1281
      %1285 = vmatprep.subr.bf16.mxu0 0
      %1286 = vmatpush1.bf16.xpose.msra.mxu0 0
      %1287 = vmatprep.subr.bf16.mxu0 0
      %1288 = vmatpush1.bf16.xpose.msra.mxu0 0
      %1289 = vmatprep.subr.bf16.mxu0 0
      %1290 = vmatpush1.bf16.xpose.msra.mxu0 0
      %1291 = vmatprep.subr.bf16.mxu0 0
      %1292 = vmatpush1.bf16.xpose.msra.mxu0 0
      %1293 = vmatprep.subr.bf16.mxu0 0
      %1294 = vmatpush1.bf16.xpose.msra.mxu0 0
      %1295 = vmatprep.subr.bf16.mxu0 0
      %1296 = vmatpush1.bf16.xpose.msra.mxu0 0
      %1297 = vmatprep.subr.bf16.mxu0 0
      %1298 = vmatpush1.bf16.xpose.msra.mxu0 0
      %1299 = vmatprep.subr.bf16.mxu0 0
      %1300 = vmatpush1.bf16.xpose.msra.mxu0 0
      %1301 = vmatprep.subr.bf16.mxu0 0
      %1302 = vmatpush1.bf16.xpose.msra.mxu0 0
      %1303 = vmatprep.subr.bf16.mxu0 0
      %1304 = vmatpush1.bf16.xpose.msra.mxu0 0
      %1305 = vmatprep.subr.bf16.mxu0 0
      %1306 = vmatpush1.bf16.xpose.msra.mxu0 0
      %1307 = vmatprep.subr.bf16.mxu0 0
      %1308 = vmatpush1.bf16.xpose.msra.mxu0 0
      %1309 = vmatprep.subr.bf16.mxu0 0
      %1310 = vmatpush1.bf16.xpose.msra.mxu0 0
      %1311 = vmatprep.subr.bf16.mxu0 0
      %1312 = vmatpush1.bf16.xpose.msra.mxu0 0
      %1313 = vmatprep.subr.bf16.mxu0 0
      %1314 = vmatpush1.bf16.xpose.msra.mxu0 0
      %1315 = vmatprep.mubr.bf16.mxu0 0
      %1316 = vmatmul.mubr.bf16.gmra.mrb[0].mxu0 %v1278
      %v1317 = vpop.f32.mrb[0].mxu0
      %v1318 = vadd.f32 0.0, %v1317
      %v1319 = vpop.f32.mrb[0].mxu0
      %v1320 = vpop.f32.mrb[0].mxu0
      %v1321 = vpop.f32.mrb[0].mxu0
      %1322 = vdwg.mxu0
      %v1324 = vsel %vm1092, %v1000, 0
      %v1327 = vsel %vm1092, %v1042, 0
      %1329 = vmatprep.subr.bf16.mxu0 0
      %1330 = vmatpush1.bf16.xpose.msra.mxu0 %v1327
      %1331 = vmatprep.subr.bf16.mxu0 0
      %1332 = vmatpush1.bf16.xpose.msra.mxu0 0
      %1333 = vmatprep.subr.bf16.mxu0 0
      %1334 = vmatpush1.bf16.xpose.msra.mxu0 0
      %1335 = vmatprep.subr.bf16.mxu0 0
      %1336 = vmatpush1.bf16.xpose.msra.mxu0 0
      %1337 = vmatprep.subr.bf16.mxu0 0
      %1338 = vmatpush1.bf16.xpose.msra.mxu0 0
      %1339 = vmatprep.subr.bf16.mxu0 0
      %1340 = vmatpush1.bf16.xpose.msra.mxu0 0
      %1341 = vmatprep.subr.bf16.mxu0 0
      %1342 = vmatpush1.bf16.xpose.msra.mxu0 0
      %1343 = vmatprep.subr.bf16.mxu0 0
      %1344 = vmatpush1.bf16.xpose.msra.mxu0 0
      %1345 = vmatprep.subr.bf16.mxu0 0
      %1346 = vmatpush1.bf16.xpose.msra.mxu0 0
      %1347 = vmatprep.subr.bf16.mxu0 0
      %1348 = vmatpush1.bf16.xpose.msra.mxu0 0
      %1349 = vmatprep.subr.bf16.mxu0 0
      %1350 = vmatpush1.bf16.xpose.msra.mxu0 0
      %1351 = vmatprep.subr.bf16.mxu0 0
      %1352 = vmatpush1.bf16.xpose.msra.mxu0 0
      %1353 = vmatprep.subr.bf16.mxu0 0
      %1354 = vmatpush1.bf16.xpose.msra.mxu0 0
      %1355 = vmatprep.subr.bf16.mxu0 0
      %1356 = vmatpush1.bf16.xpose.msra.mxu0 0
      %1357 = vmatprep.subr.bf16.mxu0 0
      %1358 = vmatpush1.bf16.xpose.msra.mxu0 0
      %1359 = vmatprep.subr.bf16.mxu0 0
      %1360 = vmatpush1.bf16.xpose.msra.mxu0 0
      %1361 = vmatprep.mubr.bf16.mxu0 0
      %1362 = vmatmul.mubr.bf16.gmra.mrb[0].mxu0 %v1324
      %v1363 = vpop.f32.mrb[0].mxu0
      %v1364 = vadd.f32 0.0, %v1363
      %v1365 = vpop.f32.mrb[0].mxu0
      %v1366 = vpop.f32.mrb[0].mxu0
      %v1367 = vpop.f32.mrb[0].mxu0
      %1368 = vdwg.mxu0
      %v1370 = vsel %vm1092, %v1001, 0
      %v1373 = vsel %vm1092, %v1043, 0
      %1375 = vmatprep.subr.bf16.mxu0 0
      %1376 = vmatpush1.bf16.xpose.msra.mxu0 %v1373
      %1377 = vmatprep.subr.bf16.mxu0 0
      %1378 = vmatpush1.bf16.xpose.msra.mxu0 0
      %1379 = vmatprep.subr.bf16.mxu0 0
      %1380 = vmatpush1.bf16.xpose.msra.mxu0 0
      %1381 = vmatprep.subr.bf16.mxu0 0
      %1382 = vmatpush1.bf16.xpose.msra.mxu0 0
      %1383 = vmatprep.subr.bf16.mxu0 0
      %1384 = vmatpush1.bf16.xpose.msra.mxu0 0
      %1385 = vmatprep.subr.bf16.mxu0 0
      %1386 = vmatpush1.bf16.xpose.msra.mxu0 0
      %1387 = vmatprep.subr.bf16.mxu0 0
      %1388 = vmatpush1.bf16.xpose.msra.mxu0 0
      %1389 = vmatprep.subr.bf16.mxu0 0
      %1390 = vmatpush1.bf16.xpose.msra.mxu0 0
      %1391 = vmatprep.subr.bf16.mxu0 0
      %1392 = vmatpush1.bf16.xpose.msra.mxu0 0
      %1393 = vmatprep.subr.bf16.mxu0 0
      %1394 = vmatpush1.bf16.xpose.msra.mxu0 0
      %1395 = vmatprep.subr.bf16.mxu0 0
      %1396 = vmatpush1.bf16.xpose.msra.mxu0 0
      %1397 = vmatprep.subr.bf16.mxu0 0
      %1398 = vmatpush1.bf16.xpose.msra.mxu0 0
      %1399 = vmatprep.subr.bf16.mxu0 0
      %1400 = vmatpush1.bf16.xpose.msra.mxu0 0
      %1401 = vmatprep.subr.bf16.mxu0 0
      %1402 = vmatpush1.bf16.xpose.msra.mxu0 0
      %1403 = vmatprep.subr.bf16.mxu0 0
      %1404 = vmatpush1.bf16.xpose.msra.mxu0 0
      %1405 = vmatprep.subr.bf16.mxu0 0
      %1406 = vmatpush1.bf16.xpose.msra.mxu0 0
      %1407 = vmatprep.mubr.bf16.mxu0 0
      %1408 = vmatmul.mubr.bf16.gmra.mrb[0].mxu0 %v1370
      %v1409 = vpop.f32.mrb[0].mxu0
      %v1410 = vadd.f32 0.0, %v1409
      %v1411 = vpop.f32.mrb[0].mxu0
      %v1412 = vpop.f32.mrb[0].mxu0
      %v1413 = vpop.f32.mrb[0].mxu0
      %1414 = vdwg.mxu0
      %v1416 = vsel %vm1092, %v1002, 0
      %v1419 = vsel %vm1092, %v1044, 0
      %1421 = vmatprep.subr.bf16.mxu0 0
      %1422 = vmatpush1.bf16.xpose.msra.mxu0 %v1419
      %1423 = vmatprep.subr.bf16.mxu0 0
      %1424 = vmatpush1.bf16.xpose.msra.mxu0 0
      %1425 = vmatprep.subr.bf16.mxu0 0
      %1426 = vmatpush1.bf16.xpose.msra.mxu0 0
      %1427 = vmatprep.subr.bf16.mxu0 0
      %1428 = vmatpush1.bf16.xpose.msra.mxu0 0
      %1429 = vmatprep.subr.bf16.mxu0 0
      %1430 = vmatpush1.bf16.xpose.msra.mxu0 0
      %1431 = vmatprep.subr.bf16.mxu0 0
      %1432 = vmatpush1.bf16.xpose.msra.mxu0 0
      %1433 = vmatprep.subr.bf16.mxu0 0
      %1434 = vmatpush1.bf16.xpose.msra.mxu0 0
      %1435 = vmatprep.subr.bf16.mxu0 0
      %1436 = vmatpush1.bf16.xpose.msra.mxu0 0
      %1437 = vmatprep.subr.bf16.mxu0 0
      %1438 = vmatpush1.bf16.xpose.msra.mxu0 0
      %1439 = vmatprep.subr.bf16.mxu0 0
      %1440 = vmatpush1.bf16.xpose.msra.mxu0 0
      %1441 = vmatprep.subr.bf16.mxu0 0
      %1442 = vmatpush1.bf16.xpose.msra.mxu0 0
      %1443 = vmatprep.subr.bf16.mxu0 0
      %1444 = vmatpush1.bf16.xpose.msra.mxu0 0
      %1445 = vmatprep.subr.bf16.mxu0 0
      %1446 = vmatpush1.bf16.xpose.msra.mxu0 0
      %1447 = vmatprep.subr.bf16.mxu0 0
      %1448 = vmatpush1.bf16.xpose.msra.mxu0 0
      %1449 = vmatprep.subr.bf16.mxu0 0
      %1450 = vmatpush1.bf16.xpose.msra.mxu0 0
      %1451 = vmatprep.subr.bf16.mxu0 0
      %1452 = vmatpush1.bf16.xpose.msra.mxu0 0
      %1453 = vmatprep.mubr.bf16.mxu0 0
      %1454 = vmatmul.mubr.bf16.gmra.mrb[0].mxu0 %v1416
      %v1455 = vpop.f32.mrb[0].mxu0
      %v1456 = vadd.f32 0.0, %v1455
      %v1457 = vpop.f32.mrb[0].mxu0
      %v1458 = vpop.f32.mrb[0].mxu0
      %v1459 = vpop.f32.mrb[0].mxu0
      %1460 = vdwg.mxu0
      %v1462 = vsel %vm1092, %v1003, 0
      %v1465 = vsel %vm1092, %v1045, 0
      %1467 = vmatprep.subr.bf16.mxu0 0
      %1468 = vmatpush1.bf16.xpose.msra.mxu0 %v1465
      %1469 = vmatprep.subr.bf16.mxu0 0
      %1470 = vmatpush1.bf16.xpose.msra.mxu0 0
      %1471 = vmatprep.subr.bf16.mxu0 0
      %1472 = vmatpush1.bf16.xpose.msra.mxu0 0
      %1473 = vmatprep.subr.bf16.mxu0 0
      %1474 = vmatpush1.bf16.xpose.msra.mxu0 0
      %1475 = vmatprep.subr.bf16.mxu0 0
      %1476 = vmatpush1.bf16.xpose.msra.mxu0 0
      %1477 = vmatprep.subr.bf16.mxu0 0
      %1478 = vmatpush1.bf16.xpose.msra.mxu0 0
      %1479 = vmatprep.subr.bf16.mxu0 0
      %1480 = vmatpush1.bf16.xpose.msra.mxu0 0
      %1481 = vmatprep.subr.bf16.mxu0 0
      %1482 = vmatpush1.bf16.xpose.msra.mxu0 0
      %1483 = vmatprep.subr.bf16.mxu0 0
      %1484 = vmatpush1.bf16.xpose.msra.mxu0 0
      %1485 = vmatprep.subr.bf16.mxu0 0
      %1486 = vmatpush1.bf16.xpose.msra.mxu0 0
      %1487 = vmatprep.subr.bf16.mxu0 0
      %1488 = vmatpush1.bf16.xpose.msra.mxu0 0
      %1489 = vmatprep.subr.bf16.mxu0 0
      %1490 = vmatpush1.bf16.xpose.msra.mxu0 0
      %1491 = vmatprep.subr.bf16.mxu0 0
      %1492 = vmatpush1.bf16.xpose.msra.mxu0 0
      %1493 = vmatprep.subr.bf16.mxu0 0
      %1494 = vmatpush1.bf16.xpose.msra.mxu0 0
      %1495 = vmatprep.subr.bf16.mxu0 0
      %1496 = vmatpush1.bf16.xpose.msra.mxu0 0
      %1497 = vmatprep.subr.bf16.mxu0 0
      %1498 = vmatpush1.bf16.xpose.msra.mxu0 0
      %1499 = vmatprep.mubr.bf16.mxu0 0
      %1500 = vmatmul.mubr.bf16.gmra.mrb[0].mxu0 %v1462
      %v1501 = vpop.f32.mrb[0].mxu0
      %v1502 = vadd.f32 0.0, %v1501
      %v1503 = vpop.f32.mrb[0].mxu0
      %v1504 = vpop.f32.mrb[0].mxu0
      %v1505 = vpop.f32.mrb[0].mxu0
      %1506 = vdwg.mxu0
      %v1508 = vsel %vm1092, %v1004, 0
      %v1511 = vsel %vm1092, %v1046, 0
      %1513 = vmatprep.subr.bf16.mxu0 0
      %1514 = vmatpush1.bf16.xpose.msra.mxu0 %v1511
      %1515 = vmatprep.subr.bf16.mxu0 0
      %1516 = vmatpush1.bf16.xpose.msra.mxu0 0
      %1517 = vmatprep.subr.bf16.mxu0 0
      %1518 = vmatpush1.bf16.xpose.msra.mxu0 0
      %1519 = vmatprep.subr.bf16.mxu0 0
      %1520 = vmatpush1.bf16.xpose.msra.mxu0 0
      %1521 = vmatprep.subr.bf16.mxu0 0
      %1522 = vmatpush1.bf16.xpose.msra.mxu0 0
      %1523 = vmatprep.subr.bf16.mxu0 0
      %1524 = vmatpush1.bf16.xpose.msra.mxu0 0
      %1525 = vmatprep.subr.bf16.mxu0 0
      %1526 = vmatpush1.bf16.xpose.msra.mxu0 0
      %1527 = vmatprep.subr.bf16.mxu0 0
      %1528 = vmatpush1.bf16.xpose.msra.mxu0 0
      %1529 = vmatprep.subr.bf16.mxu0 0
      %1530 = vmatpush1.bf16.xpose.msra.mxu0 0
      %1531 = vmatprep.subr.bf16.mxu0 0
      %1532 = vmatpush1.bf16.xpose.msra.mxu0 0
      %1533 = vmatprep.subr.bf16.mxu0 0
      %1534 = vmatpush1.bf16.xpose.msra.mxu0 0
      %1535 = vmatprep.subr.bf16.mxu0 0
      %1536 = vmatpush1.bf16.xpose.msra.mxu0 0
      %1537 = vmatprep.subr.bf16.mxu0 0
      %1538 = vmatpush1.bf16.xpose.msra.mxu0 0
      %1539 = vmatprep.subr.bf16.mxu0 0
      %1540 = vmatpush1.bf16.xpose.msra.mxu0 0
      %1541 = vmatprep.subr.bf16.mxu0 0
      %1542 = vmatpush1.bf16.xpose.msra.mxu0 0
      %1543 = vmatprep.subr.bf16.mxu0 0
      %1544 = vmatpush1.bf16.xpose.msra.mxu0 0
      %1545 = vmatprep.mubr.bf16.mxu0 0
      %1546 = vmatmul.mubr.bf16.gmra.mrb[0].mxu0 %v1508
      %v1547 = vpop.f32.mrb[0].mxu0
      %v1548 = vadd.f32 0.0, %v1547
      %v1549 = vpop.f32.mrb[0].mxu0
      %v1550 = vpop.f32.mrb[0].mxu0
      %v1551 = vpop.f32.mrb[0].mxu0
      %1552 = vdwg.mxu0
      %v1554 = vsel %vm1092, %v1005, 0
      %v1557 = vsel %vm1092, %v1047, 0
      %1559 = vmatprep.subr.bf16.mxu0 0
      %1560 = vmatpush1.bf16.xpose.msra.mxu0 %v1557
      %1561 = vmatprep.subr.bf16.mxu0 0
      %1562 = vmatpush1.bf16.xpose.msra.mxu0 0
      %1563 = vmatprep.subr.bf16.mxu0 0
      %1564 = vmatpush1.bf16.xpose.msra.mxu0 0
      %1565 = vmatprep.subr.bf16.mxu0 0
      %1566 = vmatpush1.bf16.xpose.msra.mxu0 0
      %1567 = vmatprep.subr.bf16.mxu0 0
      %1568 = vmatpush1.bf16.xpose.msra.mxu0 0
      %1569 = vmatprep.subr.bf16.mxu0 0
      %1570 = vmatpush1.bf16.xpose.msra.mxu0 0
      %1571 = vmatprep.subr.bf16.mxu0 0
      %1572 = vmatpush1.bf16.xpose.msra.mxu0 0
      %1573 = vmatprep.subr.bf16.mxu0 0
      %1574 = vmatpush1.bf16.xpose.msra.mxu0 0
      %1575 = vmatprep.subr.bf16.mxu0 0
      %1576 = vmatpush1.bf16.xpose.msra.mxu0 0
      %1577 = vmatprep.subr.bf16.mxu0 0
      %1578 = vmatpush1.bf16.xpose.msra.mxu0 0
      %1579 = vmatprep.subr.bf16.mxu0 0
      %1580 = vmatpush1.bf16.xpose.msra.mxu0 0
      %1581 = vmatprep.subr.bf16.mxu0 0
      %1582 = vmatpush1.bf16.xpose.msra.mxu0 0
      %1583 = vmatprep.subr.bf16.mxu0 0
      %1584 = vmatpush1.bf16.xpose.msra.mxu0 0
      %1585 = vmatprep.subr.bf16.mxu0 0
      %1586 = vmatpush1.bf16.xpose.msra.mxu0 0
      %1587 = vmatprep.subr.bf16.mxu0 0
      %1588 = vmatpush1.bf16.xpose.msra.mxu0 0
      %1589 = vmatprep.subr.bf16.mxu0 0
      %1590 = vmatpush1.bf16.xpose.msra.mxu0 0
      %1591 = vmatprep.mubr.bf16.mxu0 0
      %1592 = vmatmul.mubr.bf16.gmra.mrb[0].mxu0 %v1554
      %v1593 = vpop.f32.mrb[0].mxu0
      %v1594 = vadd.f32 0.0, %v1593
      %v1595 = vpop.f32.mrb[0].mxu0
      %v1596 = vpop.f32.mrb[0].mxu0
      %v1597 = vpop.f32.mrb[0].mxu0
      %1598 = vdwg.mxu0
      %v1600 = vsel %vm1092, %v1006, 0
      %v1603 = vsel %vm1092, %v1048, 0
      %1605 = vmatprep.subr.bf16.mxu0 0
      %1606 = vmatpush1.bf16.xpose.msra.mxu0 %v1603
      %1607 = vmatprep.subr.bf16.mxu0 0
      %1608 = vmatpush1.bf16.xpose.msra.mxu0 0
      %1609 = vmatprep.subr.bf16.mxu0 0
      %1610 = vmatpush1.bf16.xpose.msra.mxu0 0
      %1611 = vmatprep.subr.bf16.mxu0 0
      %1612 = vmatpush1.bf16.xpose.msra.mxu0 0
      %1613 = vmatprep.subr.bf16.mxu0 0
      %1614 = vmatpush1.bf16.xpose.msra.mxu0 0
      %1615 = vmatprep.subr.bf16.mxu0 0
      %1616 = vmatpush1.bf16.xpose.msra.mxu0 0
      %1617 = vmatprep.subr.bf16.mxu0 0
      %1618 = vmatpush1.bf16.xpose.msra.mxu0 0
      %1619 = vmatprep.subr.bf16.mxu0 0
      %1620 = vmatpush1.bf16.xpose.msra.mxu0 0
      %1621 = vmatprep.subr.bf16.mxu0 0
      %1622 = vmatpush1.bf16.xpose.msra.mxu0 0
      %1623 = vmatprep.subr.bf16.mxu0 0
      %1624 = vmatpush1.bf16.xpose.msra.mxu0 0
      %1625 = vmatprep.subr.bf16.mxu0 0
      %1626 = vmatpush1.bf16.xpose.msra.mxu0 0
      %1627 = vmatprep.subr.bf16.mxu0 0
      %1628 = vmatpush1.bf16.xpose.msra.mxu0 0
      %1629 = vmatprep.subr.bf16.mxu0 0
      %1630 = vmatpush1.bf16.xpose.msra.mxu0 0
      %1631 = vmatprep.subr.bf16.mxu0 0
      %1632 = vmatpush1.bf16.xpose.msra.mxu0 0
      %1633 = vmatprep.subr.bf16.mxu0 0
      %1634 = vmatpush1.bf16.xpose.msra.mxu0 0
      %1635 = vmatprep.subr.bf16.mxu0 0
      %1636 = vmatpush1.bf16.xpose.msra.mxu0 0
      %1637 = vmatprep.mubr.bf16.mxu0 0
      %1638 = vmatmul.mubr.bf16.gmra.mrb[0].mxu0 %v1600
      %v1639 = vpop.f32.mrb[0].mxu0
      %v1640 = vadd.f32 0.0, %v1639
      %v1641 = vpop.f32.mrb[0].mxu0
      %v1642 = vpop.f32.mrb[0].mxu0
      %v1643 = vpop.f32.mrb[0].mxu0
      %1644 = vdwg.mxu0
      %v1645 = vmul.f32 %v1134, 0.35355338
      %v1646 = vmul.f32 %v1180, 0.35355338
      %v1647 = vmul.f32 %v1226, 0.35355338
      %v1648 = vmul.f32 %v1272, 0.35355338
      %v1649 = vmul.f32 %v1318, 0.35355338
      %v1650 = vmul.f32 %v1364, 0.35355338
      %v1651 = vmul.f32 %v1410, 0.35355338
      %v1652 = vmul.f32 %v1456, 0.35355338
      %v1653 = vmul.f32 %v1502, 0.35355338
      %v1654 = vmul.f32 %v1548, 0.35355338
      %v1655 = vmul.f32 %v1594, 0.35355338
      %v1656 = vmul.f32 %v1640, 0.35355338
      %v1657 = vadd.f32 %v1645, %v1091
      %v1658 = vadd.f32 %v1646, %v1091
      %v1659 = vadd.f32 %v1647, %v1091
      %v1660 = vadd.f32 %v1648, %v1091
      %v1661 = vadd.f32 %v1649, %v1091
      %v1662 = vadd.f32 %v1650, %v1091
      %v1663 = vadd.f32 %v1651, %v1091
      %v1664 = vadd.f32 %v1652, %v1091
      %v1665 = vadd.f32 %v1653, %v1091
      %v1666 = vadd.f32 %v1654, %v1091
      %v1667 = vadd.f32 %v1655, %v1091
      %v1668 = vadd.f32 %v1656, %v1091
      %v1669 = vsel %vm1092, %v1657, -inf
      %1670 = vmax.xlane.f32.xlu0 %v1669
      %v1671 = vpop.xlane.xlu0 %1670
      %v1672 = vsel %vm1092, %v1658, -inf
      %1673 = vmax.xlane.f32.xlu0 %v1672
      %v1674 = vpop.xlane.xlu0 %1673
      %v1675 = vsel %vm1092, %v1659, -inf
      %1676 = vmax.xlane.f32.xlu0 %v1675
      %v1677 = vpop.xlane.xlu0 %1676
      %v1678 = vsel %vm1092, %v1660, -inf
      %1679 = vmax.xlane.f32.xlu0 %v1678
      %v1680 = vpop.xlane.xlu0 %1679
      %v1681 = vsel %vm1092, %v1661, -inf
      %1682 = vmax.xlane.f32.xlu0 %v1681
      %v1683 = vpop.xlane.xlu0 %1682
      %v1684 = vsel %vm1092, %v1662, -inf
      %1685 = vmax.xlane.f32.xlu0 %v1684
      %v1686 = vpop.xlane.xlu0 %1685
      %v1687 = vsel %vm1092, %v1663, -inf
      %1688 = vmax.xlane.f32.xlu0 %v1687
      %v1689 = vpop.xlane.xlu0 %1688
      %v1690 = vsel %vm1092, %v1664, -inf
      %1691 = vmax.xlane.f32.xlu0 %v1690
      %v1692 = vpop.xlane.xlu0 %1691
      %v1693 = vsel %vm1092, %v1665, -inf
      %1694 = vmax.xlane.f32.xlu0 %v1693
      %v1695 = vpop.xlane.xlu0 %1694
      %v1696 = vsel %vm1092, %v1666, -inf
      %1697 = vmax.xlane.f32.xlu0 %v1696
      %v1698 = vpop.xlane.xlu0 %1697
      %v1699 = vsel %vm1092, %v1667, -inf
      %1700 = vmax.xlane.f32.xlu0 %v1699
      %v1701 = vpop.xlane.xlu0 %1700
      %v1702 = vsel %vm1092, %v1668, -inf
      %1703 = vmax.xlane.f32.xlu0 %v1702
      %v1704 = vpop.xlane.xlu0 %1703
      %v1705 = vsub.f32 %v1657, %v1671
      %v1706 = vsub.f32 %v1658, %v1674
      %v1707 = vsub.f32 %v1659, %v1677
      %v1708 = vsub.f32 %v1660, %v1680
      %v1709 = vsub.f32 %v1661, %v1683
      %v1710 = vsub.f32 %v1662, %v1686
      %v1711 = vsub.f32 %v1663, %v1689
      %v1712 = vsub.f32 %v1664, %v1692
      %v1713 = vsub.f32 %v1665, %v1695
      %v1714 = vsub.f32 %v1666, %v1698
      %v1715 = vsub.f32 %v1667, %v1701
      %v1716 = vsub.f32 %v1668, %v1704
      %v1717 = vmul.f32 %v1705, 1.442695
      %v1718 = vpow.pop %v1717
      %v1719 = vmul.f32 %v1706, 1.442695
      %v1720 = vpow.pop %v1719
      %v1721 = vmul.f32 %v1707, 1.442695
      %v1722 = vpow.pop %v1721
      %v1723 = vmul.f32 %v1708, 1.442695
      %v1724 = vpow.pop %v1723
      %v1725 = vmul.f32 %v1709, 1.442695
      %v1726 = vpow.pop %v1725
      %v1727 = vmul.f32 %v1710, 1.442695
      %v1728 = vpow.pop %v1727
      %v1729 = vmul.f32 %v1711, 1.442695
      %v1730 = vpow.pop %v1729
      %v1731 = vmul.f32 %v1712, 1.442695
      %v1732 = vpow.pop %v1731
      %v1733 = vmul.f32 %v1713, 1.442695
      %v1734 = vpow.pop %v1733
      %v1735 = vmul.f32 %v1714, 1.442695
      %v1736 = vpow.pop %v1735
      %v1737 = vmul.f32 %v1715, 1.442695
      %v1738 = vpow.pop %v1737
      %v1739 = vmul.f32 %v1716, 1.442695
      %v1740 = vpow.pop %v1739
      %v1741 = vsel %vm1092, %v1718, 0.0
      %1742 = vadd.xlane.f32.xlu0 %v1741
      %v1743 = vpop.xlane.xlu0 %1742
      %v1744 = vsel %vm1092, %v1720, 0.0
      %1745 = vadd.xlane.f32.xlu0 %v1744
      %v1746 = vpop.xlane.xlu0 %1745
      %v1747 = vsel %vm1092, %v1722, 0.0
      %1748 = vadd.xlane.f32.xlu0 %v1747
      %v1749 = vpop.xlane.xlu0 %1748
      %v1750 = vsel %vm1092, %v1724, 0.0
      %1751 = vadd.xlane.f32.xlu0 %v1750
      %v1752 = vpop.xlane.xlu0 %1751
      %v1753 = vsel %vm1092, %v1726, 0.0
      %1754 = vadd.xlane.f32.xlu0 %v1753
      %v1755 = vpop.xlane.xlu0 %1754
      %v1756 = vsel %vm1092, %v1728, 0.0
      %1757 = vadd.xlane.f32.xlu0 %v1756
      %v1758 = vpop.xlane.xlu0 %1757
      %v1759 = vsel %vm1092, %v1730, 0.0
      %1760 = vadd.xlane.f32.xlu0 %v1759
      %v1761 = vpop.xlane.xlu0 %1760
      %v1762 = vsel %vm1092, %v1732, 0.0
      %1763 = vadd.xlane.f32.xlu0 %v1762
      %v1764 = vpop.xlane.xlu0 %1763
      %v1765 = vsel %vm1092, %v1734, 0.0
      %1766 = vadd.xlane.f32.xlu0 %v1765
      %v1767 = vpop.xlane.xlu0 %1766
      %v1768 = vsel %vm1092, %v1736, 0.0
      %1769 = vadd.xlane.f32.xlu0 %v1768
      %v1770 = vpop.xlane.xlu0 %1769
      %v1771 = vsel %vm1092, %v1738, 0.0
      %1772 = vadd.xlane.f32.xlu0 %v1771
      %v1773 = vpop.xlane.xlu0 %1772
      %v1774 = vsel %vm1092, %v1740, 0.0
      %1775 = vadd.xlane.f32.xlu0 %v1774
      %v1776 = vpop.xlane.xlu0 %1775
      %v1777 = vrcp.pop %v1743
      %v1778 = vrcp.pop %v1746
      %v1779 = vrcp.pop %v1749
      %v1780 = vrcp.pop %v1752
      %v1781 = vrcp.pop %v1755
      %v1782 = vrcp.pop %v1758
      %v1783 = vrcp.pop %v1761
      %v1784 = vrcp.pop %v1764
      %v1785 = vrcp.pop %v1767
      %v1786 = vrcp.pop %v1770
      %v1787 = vrcp.pop %v1773
      %v1788 = vrcp.pop %v1776
      %v1789 = vmul.f32 %v1718, %v1777
      %v1790 = vmul.f32 %v1720, %v1778
      %v1791 = vmul.f32 %v1722, %v1779
      %v1792 = vmul.f32 %v1724, %v1780
      %v1793 = vmul.f32 %v1726, %v1781
      %v1794 = vmul.f32 %v1728, %v1782
      %v1795 = vmul.f32 %v1730, %v1783
      %v1796 = vmul.f32 %v1732, %v1784
      %v1797 = vmul.f32 %v1734, %v1785
      %v1798 = vmul.f32 %v1736, %v1786
      %v1799 = vmul.f32 %v1738, %v1787
      %v1800 = vmul.f32 %v1740, %v1788
      %v1801 = vpack.c.bf16 %v1789, %v1789
      %v1802 = vpack.c.bf16 %v1790, %v1790
      %v1803 = vpack.c.bf16 %v1791, %v1791
      %v1804 = vpack.c.bf16 %v1792, %v1792
      %v1805 = vpack.c.bf16 %v1793, %v1793
      %v1806 = vpack.c.bf16 %v1794, %v1794
      %v1807 = vpack.c.bf16 %v1795, %v1795
      %v1808 = vpack.c.bf16 %v1796, %v1796
      %v1809 = vpack.c.bf16 %v1797, %v1797
      %v1810 = vpack.c.bf16 %v1798, %v1798
      %v1811 = vpack.c.bf16 %v1799, %v1799
      %v1812 = vpack.c.bf16 %v1800, %v1800
      %v1814 = vsel %vm1092, %v1801, 0
      %vm1816 = vcmask 1043456
      %v1818 = vsel %vm1816, %v1079, 0
      %1820 = vmatprep.subr.bf16.mxu0 0
      %1821 = vmatpush1.bf16.msra.mxu0 %v1818
      %1822 = vmatprep.subr.bf16.mxu0 0
      %1823 = vmatpush1.bf16.msra.mxu0 0
      %1824 = vmatprep.subr.bf16.mxu0 0
      %1825 = vmatpush1.bf16.msra.mxu0 0
      %1826 = vmatprep.subr.bf16.mxu0 0
      %1827 = vmatpush1.bf16.msra.mxu0 0
      %1828 = vmatprep.subr.bf16.mxu0 0
      %1829 = vmatpush1.bf16.msra.mxu0 0
      %1830 = vmatprep.subr.bf16.mxu0 0
      %1831 = vmatpush1.bf16.msra.mxu0 0
      %1832 = vmatprep.subr.bf16.mxu0 0
      %1833 = vmatpush1.bf16.msra.mxu0 0
      %1834 = vmatprep.subr.bf16.mxu0 0
      %1835 = vmatpush1.bf16.msra.mxu0 0
      %1836 = vmatprep.subr.bf16.mxu0 0
      %1837 = vmatpush1.bf16.msra.mxu0 0
      %1838 = vmatprep.subr.bf16.mxu0 0
      %1839 = vmatpush1.bf16.msra.mxu0 0
      %1840 = vmatprep.subr.bf16.mxu0 0
      %1841 = vmatpush1.bf16.msra.mxu0 0
      %1842 = vmatprep.subr.bf16.mxu0 0
      %1843 = vmatpush1.bf16.msra.mxu0 0
      %1844 = vmatprep.subr.bf16.mxu0 0
      %1845 = vmatpush1.bf16.msra.mxu0 0
      %1846 = vmatprep.subr.bf16.mxu0 0
      %1847 = vmatpush1.bf16.msra.mxu0 0
      %1848 = vmatprep.subr.bf16.mxu0 0
      %1849 = vmatpush1.bf16.msra.mxu0 0
      %1850 = vmatprep.subr.bf16.mxu0 0
      %1851 = vmatpush1.bf16.msra.mxu0 0
      %1852 = vmatprep.mubr.bf16.mxu0 0
      %1853 = vmatmul.mubr.bf16.gmra.mrb[0].mxu0 %v1814
      %v1854 = vpop.f32.mrb[0].mxu0
      %v1855 = vadd.f32 0.0, %v1854
      %v1856 = vpop.f32.mrb[0].mxu0
      %v1857 = vpop.f32.mrb[0].mxu0
      %v1858 = vpop.f32.mrb[0].mxu0
      %1859 = vdwg.mxu0
      %v1861 = vsel %vm1092, %v1802, 0
      %v1864 = vsel %vm1816, %v1080, 0
      %1866 = vmatprep.subr.bf16.mxu0 0
      %1867 = vmatpush1.bf16.msra.mxu0 %v1864
      %1868 = vmatprep.subr.bf16.mxu0 0
      %1869 = vmatpush1.bf16.msra.mxu0 0
      %1870 = vmatprep.subr.bf16.mxu0 0
      %1871 = vmatpush1.bf16.msra.mxu0 0
      %1872 = vmatprep.subr.bf16.mxu0 0
      %1873 = vmatpush1.bf16.msra.mxu0 0
      %1874 = vmatprep.subr.bf16.mxu0 0
      %1875 = vmatpush1.bf16.msra.mxu0 0
      %1876 = vmatprep.subr.bf16.mxu0 0
      %1877 = vmatpush1.bf16.msra.mxu0 0
      %1878 = vmatprep.subr.bf16.mxu0 0
      %1879 = vmatpush1.bf16.msra.mxu0 0
      %1880 = vmatprep.subr.bf16.mxu0 0
      %1881 = vmatpush1.bf16.msra.mxu0 0
      %1882 = vmatprep.subr.bf16.mxu0 0
      %1883 = vmatpush1.bf16.msra.mxu0 0
      %1884 = vmatprep.subr.bf16.mxu0 0
      %1885 = vmatpush1.bf16.msra.mxu0 0
      %1886 = vmatprep.subr.bf16.mxu0 0
      %1887 = vmatpush1.bf16.msra.mxu0 0
      %1888 = vmatprep.subr.bf16.mxu0 0
      %1889 = vmatpush1.bf16.msra.mxu0 0
      %1890 = vmatprep.subr.bf16.mxu0 0
      %1891 = vmatpush1.bf16.msra.mxu0 0
      %1892 = vmatprep.subr.bf16.mxu0 0
      %1893 = vmatpush1.bf16.msra.mxu0 0
      %1894 = vmatprep.subr.bf16.mxu0 0
      %1895 = vmatpush1.bf16.msra.mxu0 0
      %1896 = vmatprep.subr.bf16.mxu0 0
      %1897 = vmatpush1.bf16.msra.mxu0 0
      %1898 = vmatprep.mubr.bf16.mxu0 0
      %1899 = vmatmul.mubr.bf16.gmra.mrb[0].mxu0 %v1861
      %v1900 = vpop.f32.mrb[0].mxu0
      %v1901 = vadd.f32 0.0, %v1900
      %v1902 = vpop.f32.mrb[0].mxu0
      %v1903 = vpop.f32.mrb[0].mxu0
      %v1904 = vpop.f32.mrb[0].mxu0
      %1905 = vdwg.mxu0
      %v1907 = vsel %vm1092, %v1803, 0
      %v1910 = vsel %vm1816, %v1081, 0
      %1912 = vmatprep.subr.bf16.mxu0 0
      %1913 = vmatpush1.bf16.msra.mxu0 %v1910
      %1914 = vmatprep.subr.bf16.mxu0 0
      %1915 = vmatpush1.bf16.msra.mxu0 0
      %1916 = vmatprep.subr.bf16.mxu0 0
      %1917 = vmatpush1.bf16.msra.mxu0 0
      %1918 = vmatprep.subr.bf16.mxu0 0
      %1919 = vmatpush1.bf16.msra.mxu0 0
      %1920 = vmatprep.subr.bf16.mxu0 0
      %1921 = vmatpush1.bf16.msra.mxu0 0
      %1922 = vmatprep.subr.bf16.mxu0 0
      %1923 = vmatpush1.bf16.msra.mxu0 0
      %1924 = vmatprep.subr.bf16.mxu0 0
      %1925 = vmatpush1.bf16.msra.mxu0 0
      %1926 = vmatprep.subr.bf16.mxu0 0
      %1927 = vmatpush1.bf16.msra.mxu0 0
      %1928 = vmatprep.subr.bf16.mxu0 0
      %1929 = vmatpush1.bf16.msra.mxu0 0
      %1930 = vmatprep.subr.bf16.mxu0 0
      %1931 = vmatpush1.bf16.msra.mxu0 0
      %1932 = vmatprep.subr.bf16.mxu0 0
      %1933 = vmatpush1.bf16.msra.mxu0 0
      %1934 = vmatprep.subr.bf16.mxu0 0
      %1935 = vmatpush1.bf16.msra.mxu0 0
      %1936 = vmatprep.subr.bf16.mxu0 0
      %1937 = vmatpush1.bf16.msra.mxu0 0
      %1938 = vmatprep.subr.bf16.mxu0 0
      %1939 = vmatpush1.bf16.msra.mxu0 0
      %1940 = vmatprep.subr.bf16.mxu0 0
      %1941 = vmatpush1.bf16.msra.mxu0 0
      %1942 = vmatprep.subr.bf16.mxu0 0
      %1943 = vmatpush1.bf16.msra.mxu0 0
      %1944 = vmatprep.mubr.bf16.mxu0 0
      %1945 = vmatmul.mubr.bf16.gmra.mrb[0].mxu0 %v1907
      %v1946 = vpop.f32.mrb[0].mxu0
      %v1947 = vadd.f32 0.0, %v1946
      %v1948 = vpop.f32.mrb[0].mxu0
      %v1949 = vpop.f32.mrb[0].mxu0
      %v1950 = vpop.f32.mrb[0].mxu0
      %1951 = vdwg.mxu0
      %v1953 = vsel %vm1092, %v1804, 0
      %v1956 = vsel %vm1816, %v1082, 0
      %1958 = vmatprep.subr.bf16.mxu0 0
      %1959 = vmatpush1.bf16.msra.mxu0 %v1956
      %1960 = vmatprep.subr.bf16.mxu0 0
      %1961 = vmatpush1.bf16.msra.mxu0 0
      %1962 = vmatprep.subr.bf16.mxu0 0
      %1963 = vmatpush1.bf16.msra.mxu0 0
      %1964 = vmatprep.subr.bf16.mxu0 0
      %1965 = vmatpush1.bf16.msra.mxu0 0
      %1966 = vmatprep.subr.bf16.mxu0 0
      %1967 = vmatpush1.bf16.msra.mxu0 0
      %1968 = vmatprep.subr.bf16.mxu0 0
      %1969 = vmatpush1.bf16.msra.mxu0 0
      %1970 = vmatprep.subr.bf16.mxu0 0
      %1971 = vmatpush1.bf16.msra.mxu0 0
      %1972 = vmatprep.subr.bf16.mxu0 0
      %1973 = vmatpush1.bf16.msra.mxu0 0
      %1974 = vmatprep.subr.bf16.mxu0 0
      %1975 = vmatpush1.bf16.msra.mxu0 0
      %1976 = vmatprep.subr.bf16.mxu0 0
      %1977 = vmatpush1.bf16.msra.mxu0 0
      %1978 = vmatprep.subr.bf16.mxu0 0
      %1979 = vmatpush1.bf16.msra.mxu0 0
      %1980 = vmatprep.subr.bf16.mxu0 0
      %1981 = vmatpush1.bf16.msra.mxu0 0
      %1982 = vmatprep.subr.bf16.mxu0 0
      %1983 = vmatpush1.bf16.msra.mxu0 0
      %1984 = vmatprep.subr.bf16.mxu0 0
      %1985 = vmatpush1.bf16.msra.mxu0 0
      %1986 = vmatprep.subr.bf16.mxu0 0
      %1987 = vmatpush1.bf16.msra.mxu0 0
      %1988 = vmatprep.subr.bf16.mxu0 0
      %1989 = vmatpush1.bf16.msra.mxu0 0
      %1990 = vmatprep.mubr.bf16.mxu0 0
      %1991 = vmatmul.mubr.bf16.gmra.mrb[0].mxu0 %v1953
      %v1992 = vpop.f32.mrb[0].mxu0
      %v1993 = vadd.f32 0.0, %v1992
      %v1994 = vpop.f32.mrb[0].mxu0
      %v1995 = vpop.f32.mrb[0].mxu0
      %v1996 = vpop.f32.mrb[0].mxu0
      %1997 = vdwg.mxu0
      %v1999 = vsel %vm1092, %v1805, 0
      %v2002 = vsel %vm1816, %v1083, 0
      %2004 = vmatprep.subr.bf16.mxu0 0
      %2005 = vmatpush1.bf16.msra.mxu0 %v2002
      %2006 = vmatprep.subr.bf16.mxu0 0
      %2007 = vmatpush1.bf16.msra.mxu0 0
      %2008 = vmatprep.subr.bf16.mxu0 0
      %2009 = vmatpush1.bf16.msra.mxu0 0
      %2010 = vmatprep.subr.bf16.mxu0 0
      %2011 = vmatpush1.bf16.msra.mxu0 0
      %2012 = vmatprep.subr.bf16.mxu0 0
      %2013 = vmatpush1.bf16.msra.mxu0 0
      %2014 = vmatprep.subr.bf16.mxu0 0
      %2015 = vmatpush1.bf16.msra.mxu0 0
      %2016 = vmatprep.subr.bf16.mxu0 0
      %2017 = vmatpush1.bf16.msra.mxu0 0
      %2018 = vmatprep.subr.bf16.mxu0 0
      %2019 = vmatpush1.bf16.msra.mxu0 0
      %2020 = vmatprep.subr.bf16.mxu0 0
      %2021 = vmatpush1.bf16.msra.mxu0 0
      %2022 = vmatprep.subr.bf16.mxu0 0
      %2023 = vmatpush1.bf16.msra.mxu0 0
      %2024 = vmatprep.subr.bf16.mxu0 0
      %2025 = vmatpush1.bf16.msra.mxu0 0
      %2026 = vmatprep.subr.bf16.mxu0 0
      %2027 = vmatpush1.bf16.msra.mxu0 0
      %2028 = vmatprep.subr.bf16.mxu0 0
      %2029 = vmatpush1.bf16.msra.mxu0 0
      %2030 = vmatprep.subr.bf16.mxu0 0
      %2031 = vmatpush1.bf16.msra.mxu0 0
      %2032 = vmatprep.subr.bf16.mxu0 0
      %2033 = vmatpush1.bf16.msra.mxu0 0
      %2034 = vmatprep.subr.bf16.mxu0 0
      %2035 = vmatpush1.bf16.msra.mxu0 0
      %2036 = vmatprep.mubr.bf16.mxu0 0
      %2037 = vmatmul.mubr.bf16.gmra.mrb[0].mxu0 %v1999
      %v2038 = vpop.f32.mrb[0].mxu0
      %v2039 = vadd.f32 0.0, %v2038
      %v2040 = vpop.f32.mrb[0].mxu0
      %v2041 = vpop.f32.mrb[0].mxu0
      %v2042 = vpop.f32.mrb[0].mxu0
      %2043 = vdwg.mxu0
      %v2045 = vsel %vm1092, %v1806, 0
      %v2048 = vsel %vm1816, %v1084, 0
      %2050 = vmatprep.subr.bf16.mxu0 0
      %2051 = vmatpush1.bf16.msra.mxu0 %v2048
      %2052 = vmatprep.subr.bf16.mxu0 0
      %2053 = vmatpush1.bf16.msra.mxu0 0
      %2054 = vmatprep.subr.bf16.mxu0 0
      %2055 = vmatpush1.bf16.msra.mxu0 0
      %2056 = vmatprep.subr.bf16.mxu0 0
      %2057 = vmatpush1.bf16.msra.mxu0 0
      %2058 = vmatprep.subr.bf16.mxu0 0
      %2059 = vmatpush1.bf16.msra.mxu0 0
      %2060 = vmatprep.subr.bf16.mxu0 0
      %2061 = vmatpush1.bf16.msra.mxu0 0
      %2062 = vmatprep.subr.bf16.mxu0 0
      %2063 = vmatpush1.bf16.msra.mxu0 0
      %2064 = vmatprep.subr.bf16.mxu0 0
      %2065 = vmatpush1.bf16.msra.mxu0 0
      %2066 = vmatprep.subr.bf16.mxu0 0
      %2067 = vmatpush1.bf16.msra.mxu0 0
      %2068 = vmatprep.subr.bf16.mxu0 0
      %2069 = vmatpush1.bf16.msra.mxu0 0
      %2070 = vmatprep.subr.bf16.mxu0 0
      %2071 = vmatpush1.bf16.msra.mxu0 0
      %2072 = vmatprep.subr.bf16.mxu0 0
      %2073 = vmatpush1.bf16.msra.mxu0 0
      %2074 = vmatprep.subr.bf16.mxu0 0
      %2075 = vmatpush1.bf16.msra.mxu0 0
      %2076 = vmatprep.subr.bf16.mxu0 0
      %2077 = vmatpush1.bf16.msra.mxu0 0
      %2078 = vmatprep.subr.bf16.mxu0 0
      %2079 = vmatpush1.bf16.msra.mxu0 0
      %2080 = vmatprep.subr.bf16.mxu0 0
      %2081 = vmatpush1.bf16.msra.mxu0 0
      %2082 = vmatprep.mubr.bf16.mxu0 0
      %2083 = vmatmul.mubr.bf16.gmra.mrb[0].mxu0 %v2045
      %v2084 = vpop.f32.mrb[0].mxu0
      %v2085 = vadd.f32 0.0, %v2084
      %v2086 = vpop.f32.mrb[0].mxu0
      %v2087 = vpop.f32.mrb[0].mxu0
      %v2088 = vpop.f32.mrb[0].mxu0
      %2089 = vdwg.mxu0
      %v2091 = vsel %vm1092, %v1807, 0
      %v2094 = vsel %vm1816, %v1085, 0
      %2096 = vmatprep.subr.bf16.mxu0 0
      %2097 = vmatpush1.bf16.msra.mxu0 %v2094
      %2098 = vmatprep.subr.bf16.mxu0 0
      %2099 = vmatpush1.bf16.msra.mxu0 0
      %2100 = vmatprep.subr.bf16.mxu0 0
      %2101 = vmatpush1.bf16.msra.mxu0 0
      %2102 = vmatprep.subr.bf16.mxu0 0
      %2103 = vmatpush1.bf16.msra.mxu0 0
      %2104 = vmatprep.subr.bf16.mxu0 0
      %2105 = vmatpush1.bf16.msra.mxu0 0
      %2106 = vmatprep.subr.bf16.mxu0 0
      %2107 = vmatpush1.bf16.msra.mxu0 0
      %2108 = vmatprep.subr.bf16.mxu0 0
      %2109 = vmatpush1.bf16.msra.mxu0 0
      %2110 = vmatprep.subr.bf16.mxu0 0
      %2111 = vmatpush1.bf16.msra.mxu0 0
      %2112 = vmatprep.subr.bf16.mxu0 0
      %2113 = vmatpush1.bf16.msra.mxu0 0
      %2114 = vmatprep.subr.bf16.mxu0 0
      %2115 = vmatpush1.bf16.msra.mxu0 0
      %2116 = vmatprep.subr.bf16.mxu0 0
      %2117 = vmatpush1.bf16.msra.mxu0 0
      %2118 = vmatprep.subr.bf16.mxu0 0
      %2119 = vmatpush1.bf16.msra.mxu0 0
      %2120 = vmatprep.subr.bf16.mxu0 0
      %2121 = vmatpush1.bf16.msra.mxu0 0
      %2122 = vmatprep.subr.bf16.mxu0 0
      %2123 = vmatpush1.bf16.msra.mxu0 0
      %2124 = vmatprep.subr.bf16.mxu0 0
      %2125 = vmatpush1.bf16.msra.mxu0 0
      %2126 = vmatprep.subr.bf16.mxu0 0
      %2127 = vmatpush1.bf16.msra.mxu0 0
      %2128 = vmatprep.mubr.bf16.mxu0 0
      %2129 = vmatmul.mubr.bf16.gmra.mrb[0].mxu0 %v2091
      %v2130 = vpop.f32.mrb[0].mxu0
      %v2131 = vadd.f32 0.0, %v2130
      %v2132 = vpop.f32.mrb[0].mxu0
      %v2133 = vpop.f32.mrb[0].mxu0
      %v2134 = vpop.f32.mrb[0].mxu0
      %2135 = vdwg.mxu0
      %v2137 = vsel %vm1092, %v1808, 0
      %v2140 = vsel %vm1816, %v1086, 0
      %2142 = vmatprep.subr.bf16.mxu0 0
      %2143 = vmatpush1.bf16.msra.mxu0 %v2140
      %2144 = vmatprep.subr.bf16.mxu0 0
      %2145 = vmatpush1.bf16.msra.mxu0 0
      %2146 = vmatprep.subr.bf16.mxu0 0
      %2147 = vmatpush1.bf16.msra.mxu0 0
      %2148 = vmatprep.subr.bf16.mxu0 0
      %2149 = vmatpush1.bf16.msra.mxu0 0
      %2150 = vmatprep.subr.bf16.mxu0 0
      %2151 = vmatpush1.bf16.msra.mxu0 0
      %2152 = vmatprep.subr.bf16.mxu0 0
      %2153 = vmatpush1.bf16.msra.mxu0 0
      %2154 = vmatprep.subr.bf16.mxu0 0
      %2155 = vmatpush1.bf16.msra.mxu0 0
      %2156 = vmatprep.subr.bf16.mxu0 0
      %2157 = vmatpush1.bf16.msra.mxu0 0
      %2158 = vmatprep.subr.bf16.mxu0 0
      %2159 = vmatpush1.bf16.msra.mxu0 0
      %2160 = vmatprep.subr.bf16.mxu0 0
      %2161 = vmatpush1.bf16.msra.mxu0 0
      %2162 = vmatprep.subr.bf16.mxu0 0
      %2163 = vmatpush1.bf16.msra.mxu0 0
      %2164 = vmatprep.subr.bf16.mxu0 0
      %2165 = vmatpush1.bf16.msra.mxu0 0
      %2166 = vmatprep.subr.bf16.mxu0 0
      %2167 = vmatpush1.bf16.msra.mxu0 0
      %2168 = vmatprep.subr.bf16.mxu0 0
      %2169 = vmatpush1.bf16.msra.mxu0 0
      %2170 = vmatprep.subr.bf16.mxu0 0
      %2171 = vmatpush1.bf16.msra.mxu0 0
      %2172 = vmatprep.subr.bf16.mxu0 0
      %2173 = vmatpush1.bf16.msra.mxu0 0
      %2174 = vmatprep.mubr.bf16.mxu0 0
      %2175 = vmatmul.mubr.bf16.gmra.mrb[0].mxu0 %v2137
      %v2176 = vpop.f32.mrb[0].mxu0
      %v2177 = vadd.f32 0.0, %v2176
      %v2178 = vpop.f32.mrb[0].mxu0
      %v2179 = vpop.f32.mrb[0].mxu0
      %v2180 = vpop.f32.mrb[0].mxu0
      %2181 = vdwg.mxu0
      %v2183 = vsel %vm1092, %v1809, 0
      %v2186 = vsel %vm1816, %v1087, 0
      %2188 = vmatprep.subr.bf16.mxu0 0
      %2189 = vmatpush1.bf16.msra.mxu0 %v2186
      %2190 = vmatprep.subr.bf16.mxu0 0
      %2191 = vmatpush1.bf16.msra.mxu0 0
      %2192 = vmatprep.subr.bf16.mxu0 0
      %2193 = vmatpush1.bf16.msra.mxu0 0
      %2194 = vmatprep.subr.bf16.mxu0 0
      %2195 = vmatpush1.bf16.msra.mxu0 0
      %2196 = vmatprep.subr.bf16.mxu0 0
      %2197 = vmatpush1.bf16.msra.mxu0 0
      %2198 = vmatprep.subr.bf16.mxu0 0
      %2199 = vmatpush1.bf16.msra.mxu0 0
      %2200 = vmatprep.subr.bf16.mxu0 0
      %2201 = vmatpush1.bf16.msra.mxu0 0
      %2202 = vmatprep.subr.bf16.mxu0 0
      %2203 = vmatpush1.bf16.msra.mxu0 0
      %2204 = vmatprep.subr.bf16.mxu0 0
      %2205 = vmatpush1.bf16.msra.mxu0 0
      %2206 = vmatprep.subr.bf16.mxu0 0
      %2207 = vmatpush1.bf16.msra.mxu0 0
      %2208 = vmatprep.subr.bf16.mxu0 0
      %2209 = vmatpush1.bf16.msra.mxu0 0
      %2210 = vmatprep.subr.bf16.mxu0 0
      %2211 = vmatpush1.bf16.msra.mxu0 0
      %2212 = vmatprep.subr.bf16.mxu0 0
      %2213 = vmatpush1.bf16.msra.mxu0 0
      %2214 = vmatprep.subr.bf16.mxu0 0
      %2215 = vmatpush1.bf16.msra.mxu0 0
      %2216 = vmatprep.subr.bf16.mxu0 0
      %2217 = vmatpush1.bf16.msra.mxu0 0
      %2218 = vmatprep.subr.bf16.mxu0 0
      %2219 = vmatpush1.bf16.msra.mxu0 0
      %2220 = vmatprep.mubr.bf16.mxu0 0
      %2221 = vmatmul.mubr.bf16.gmra.mrb[0].mxu0 %v2183
      %v2222 = vpop.f32.mrb[0].mxu0
      %v2223 = vadd.f32 0.0, %v2222
      %v2224 = vpop.f32.mrb[0].mxu0
      %v2225 = vpop.f32.mrb[0].mxu0
      %v2226 = vpop.f32.mrb[0].mxu0
      %2227 = vdwg.mxu0
      %v2229 = vsel %vm1092, %v1810, 0
      %v2232 = vsel %vm1816, %v1088, 0
      %2234 = vmatprep.subr.bf16.mxu0 0
      %2235 = vmatpush1.bf16.msra.mxu0 %v2232
      %2236 = vmatprep.subr.bf16.mxu0 0
      %2237 = vmatpush1.bf16.msra.mxu0 0
      %2238 = vmatprep.subr.bf16.mxu0 0
      %2239 = vmatpush1.bf16.msra.mxu0 0
      %2240 = vmatprep.subr.bf16.mxu0 0
      %2241 = vmatpush1.bf16.msra.mxu0 0
      %2242 = vmatprep.subr.bf16.mxu0 0
      %2243 = vmatpush1.bf16.msra.mxu0 0
      %2244 = vmatprep.subr.bf16.mxu0 0
      %2245 = vmatpush1.bf16.msra.mxu0 0
      %2246 = vmatprep.subr.bf16.mxu0 0
      %2247 = vmatpush1.bf16.msra.mxu0 0
      %2248 = vmatprep.subr.bf16.mxu0 0
      %2249 = vmatpush1.bf16.msra.mxu0 0
      %2250 = vmatprep.subr.bf16.mxu0 0
      %2251 = vmatpush1.bf16.msra.mxu0 0
      %2252 = vmatprep.subr.bf16.mxu0 0
      %2253 = vmatpush1.bf16.msra.mxu0 0
      %2254 = vmatprep.subr.bf16.mxu0 0
      %2255 = vmatpush1.bf16.msra.mxu0 0
      %2256 = vmatprep.subr.bf16.mxu0 0
      %2257 = vmatpush1.bf16.msra.mxu0 0
      %2258 = vmatprep.subr.bf16.mxu0 0
      %2259 = vmatpush1.bf16.msra.mxu0 0
      %2260 = vmatprep.subr.bf16.mxu0 0
      %2261 = vmatpush1.bf16.msra.mxu0 0
      %2262 = vmatprep.subr.bf16.mxu0 0
      %2263 = vmatpush1.bf16.msra.mxu0 0
      %2264 = vmatprep.subr.bf16.mxu0 0
      %2265 = vmatpush1.bf16.msra.mxu0 0
      %2266 = vmatprep.mubr.bf16.mxu0 0
      %2267 = vmatmul.mubr.bf16.gmra.mrb[0].mxu0 %v2229
      %v2268 = vpop.f32.mrb[0].mxu0
      %v2269 = vadd.f32 0.0, %v2268
      %v2270 = vpop.f32.mrb[0].mxu0
      %v2271 = vpop.f32.mrb[0].mxu0
      %v2272 = vpop.f32.mrb[0].mxu0
      %2273 = vdwg.mxu0
      %v2275 = vsel %vm1092, %v1811, 0
      %v2278 = vsel %vm1816, %v1089, 0
      %2280 = vmatprep.subr.bf16.mxu0 0
      %2281 = vmatpush1.bf16.msra.mxu0 %v2278
      %2282 = vmatprep.subr.bf16.mxu0 0
      %2283 = vmatpush1.bf16.msra.mxu0 0
      %2284 = vmatprep.subr.bf16.mxu0 0
      %2285 = vmatpush1.bf16.msra.mxu0 0
      %2286 = vmatprep.subr.bf16.mxu0 0
      %2287 = vmatpush1.bf16.msra.mxu0 0
      %2288 = vmatprep.subr.bf16.mxu0 0
      %2289 = vmatpush1.bf16.msra.mxu0 0
      %2290 = vmatprep.subr.bf16.mxu0 0
      %2291 = vmatpush1.bf16.msra.mxu0 0
      %2292 = vmatprep.subr.bf16.mxu0 0
      %2293 = vmatpush1.bf16.msra.mxu0 0
      %2294 = vmatprep.subr.bf16.mxu0 0
      %2295 = vmatpush1.bf16.msra.mxu0 0
      %2296 = vmatprep.subr.bf16.mxu0 0
      %2297 = vmatpush1.bf16.msra.mxu0 0
      %2298 = vmatprep.subr.bf16.mxu0 0
      %2299 = vmatpush1.bf16.msra.mxu0 0
      %2300 = vmatprep.subr.bf16.mxu0 0
      %2301 = vmatpush1.bf16.msra.mxu0 0
      %2302 = vmatprep.subr.bf16.mxu0 0
      %2303 = vmatpush1.bf16.msra.mxu0 0
      %2304 = vmatprep.subr.bf16.mxu0 0
      %2305 = vmatpush1.bf16.msra.mxu0 0
      %2306 = vmatprep.subr.bf16.mxu0 0
      %2307 = vmatpush1.bf16.msra.mxu0 0
      %2308 = vmatprep.subr.bf16.mxu0 0
      %2309 = vmatpush1.bf16.msra.mxu0 0
      %2310 = vmatprep.subr.bf16.mxu0 0
      %2311 = vmatpush1.bf16.msra.mxu0 0
      %2312 = vmatprep.mubr.bf16.mxu0 0
      %2313 = vmatmul.mubr.bf16.gmra.mrb[0].mxu0 %v2275
      %v2314 = vpop.f32.mrb[0].mxu0
      %v2315 = vadd.f32 0.0, %v2314
      %v2316 = vpop.f32.mrb[0].mxu0
      %v2317 = vpop.f32.mrb[0].mxu0
      %v2318 = vpop.f32.mrb[0].mxu0
      %2319 = vdwg.mxu0
      %v2321 = vsel %vm1092, %v1812, 0
      %v2324 = vsel %vm1816, %v1090, 0
      %2326 = vmatprep.subr.bf16.mxu0 0
      %2327 = vmatpush1.bf16.msra.mxu0 %v2324
      %2328 = vmatprep.subr.bf16.mxu0 0
      %2329 = vmatpush1.bf16.msra.mxu0 0
      %2330 = vmatprep.subr.bf16.mxu0 0
      %2331 = vmatpush1.bf16.msra.mxu0 0
      %2332 = vmatprep.subr.bf16.mxu0 0
      %2333 = vmatpush1.bf16.msra.mxu0 0
      %2334 = vmatprep.subr.bf16.mxu0 0
      %2335 = vmatpush1.bf16.msra.mxu0 0
      %2336 = vmatprep.subr.bf16.mxu0 0
      %2337 = vmatpush1.bf16.msra.mxu0 0
      %2338 = vmatprep.subr.bf16.mxu0 0
      %2339 = vmatpush1.bf16.msra.mxu0 0
      %2340 = vmatprep.subr.bf16.mxu0 0
      %2341 = vmatpush1.bf16.msra.mxu0 0
      %2342 = vmatprep.subr.bf16.mxu0 0
      %2343 = vmatpush1.bf16.msra.mxu0 0
      %2344 = vmatprep.subr.bf16.mxu0 0
      %2345 = vmatpush1.bf16.msra.mxu0 0
      %2346 = vmatprep.subr.bf16.mxu0 0
      %2347 = vmatpush1.bf16.msra.mxu0 0
      %2348 = vmatprep.subr.bf16.mxu0 0
      %2349 = vmatpush1.bf16.msra.mxu0 0
      %2350 = vmatprep.subr.bf16.mxu0 0
      %2351 = vmatpush1.bf16.msra.mxu0 0
      %2352 = vmatprep.subr.bf16.mxu0 0
      %2353 = vmatpush1.bf16.msra.mxu0 0
      %2354 = vmatprep.subr.bf16.mxu0 0
      %2355 = vmatpush1.bf16.msra.mxu0 0
      %2356 = vmatprep.subr.bf16.mxu0 0
      %2357 = vmatpush1.bf16.msra.mxu0 0
      %2358 = vmatprep.mubr.bf16.mxu0 0
      %2359 = vmatmul.mubr.bf16.gmra.mrb[0].mxu0 %v2321
      %v2360 = vpop.f32.mrb[0].mxu0
      %v2361 = vadd.f32 0.0, %v2360
      %v2362 = vpop.f32.mrb[0].mxu0
      %v2363 = vpop.f32.mrb[0].mxu0
      %v2364 = vpop.f32.mrb[0].mxu0
      %2365 = vdwg.mxu0
      %2369 = vrot.lane.b32.xlu0 %v1993, 8
      %v2370 = vpop.permute.xlu0 %2369
      %2371 = vrot.lane.b32.xlu0 %v2039, 8
      %v2372 = vpop.permute.xlu0 %2371
      %2373 = vrot.lane.b32.xlu0 %v2085, 8
      %v2374 = vpop.permute.xlu0 %2373
      %2381 = vrot.lane.b32.xlu0 %v2131, 16
      %v2382 = vpop.permute.xlu0 %2381
      %2383 = vrot.lane.b32.xlu0 %v2177, 16
      %v2384 = vpop.permute.xlu0 %2383
      %2385 = vrot.lane.b32.xlu0 %v2223, 16
      %v2386 = vpop.permute.xlu0 %2385
      %2393 = vrot.lane.b32.xlu0 %v2269, 24
      %v2394 = vpop.permute.xlu0 %2393
      %2395 = vrot.lane.b32.xlu0 %v2315, 24
      %v2396 = vpop.permute.xlu0 %2395
      %2397 = vrot.lane.b32.xlu0 %v2361, 24
      %v2398 = vpop.permute.xlu0 %2397
      %v2402 = vsel %vm1092, %v1855, %v2370
      %v2403 = vsel %vm1092, %v1901, %v2372
      %v2404 = vsel %vm1092, %v1947, %v2374
      %vm2405 = vcmask 130048
      %v2406 = vsel %vm2405, %v2402, %v2382
      %v2407 = vsel %vm2405, %v2403, %v2384
      %v2408 = vsel %vm2405, %v2404, %v2386
      %vm2409 = vcmask 195584
      %v2410 = vsel %vm2409, %v2406, %v2394
      %v2411 = vsel %vm2409, %v2407, %v2396
      %v2412 = vsel %vm2409, %v2408, %v2398
      %v2413 = vpack.c.bf16 %v2411, %v2410
      %v2414 = vpack.c.bf16 %v2412, %v2412
      %v2415 = vld [vmem:[%s10] sm:$0xf]
      %v2416 = vld [vmem:[%s10 + $0x4] sm:$0xf]
      %v2417 = vld [vmem:[%s10 + $0x8] sm:$0xf]
      %v2418 = vld [vmem:[%s10 + $0xc] sm:$0xf]
      %v2419 = vld [vmem:[%s11] sm:$0x1]
      %v2421 = vlaneseq
      %v2422 = vshrl.u32 %v2421, 7
      %v2423 = vsub.s32 0, %v2422
      %v2424 = vrot.slane %v2419, %v2423
      %v2430 = vunpack.c.l.b16 %v2415
      %v2431 = vunpack.c.l.b16 %v2416
      %v2432 = vunpack.c.l.b16 %v2417
      %v2433 = vunpack.c.l.b16 %v2418
      %v2434 = vpack.c.b16 %v2431, %v2430
      %v2435 = vpack.c.b16 %v2433, %v2432
      %v2439 = vsel %vm598, %v2413, 0
      %v2442 = vsel %vm598, %v2414, 0
      %2444 = vmatprep.subr.bf16.mxu0 0
      %2445 = vmatpush1.bf16.msra.mxu0 %v2434
      %2446 = vmatprep.subr.bf16.mxu0 0
      %2447 = vmatpush1.bf16.msra.mxu0 %v2435
      %2448 = vmatprep.subr.bf16.mxu0 0
      %2449 = vmatpush1.bf16.msra.mxu0 0
      %2450 = vmatprep.subr.bf16.mxu0 0
      %2451 = vmatpush1.bf16.msra.mxu0 0
      %2452 = vmatprep.subr.bf16.mxu0 0
      %2453 = vmatpush1.bf16.msra.mxu0 0
      %2454 = vmatprep.subr.bf16.mxu0 0
      %2455 = vmatpush1.bf16.msra.mxu0 0
      %2456 = vmatprep.subr.bf16.mxu0 0
      %2457 = vmatpush1.bf16.msra.mxu0 0
      %2458 = vmatprep.subr.bf16.mxu0 0
      %2459 = vmatpush1.bf16.msra.mxu0 0
      %2460 = vmatprep.subr.bf16.mxu0 0
      %2461 = vmatpush1.bf16.msra.mxu0 0
      %2462 = vmatprep.subr.bf16.mxu0 0
      %2463 = vmatpush1.bf16.msra.mxu0 0
      %2464 = vmatprep.subr.bf16.mxu0 0
      %2465 = vmatpush1.bf16.msra.mxu0 0
      %2466 = vmatprep.subr.bf16.mxu0 0
      %2467 = vmatpush1.bf16.msra.mxu0 0
      %2468 = vmatprep.subr.bf16.mxu0 0
      %2469 = vmatpush1.bf16.msra.mxu0 0
      %2470 = vmatprep.subr.bf16.mxu0 0
      %2471 = vmatpush1.bf16.msra.mxu0 0
      %2472 = vmatprep.subr.bf16.mxu0 0
      %2473 = vmatpush1.bf16.msra.mxu0 0
      %2474 = vmatprep.subr.bf16.mxu0 0
      %2475 = vmatpush1.bf16.msra.mxu0 0
      %2476 = vmatprep.mubr.bf16.mxu0 0
      %2477 = vmatmul.mubr.bf16.gmra.mrb[0].mxu0 %v2439
      %v2478 = vpop.f32.mrb[0].mxu0
      %v2479 = vadd.f32 %v2424, %v2478
      %v2480 = vpop.f32.mrb[0].mxu0
      %v2481 = vpop.f32.mrb[0].mxu0
      %v2482 = vadd.f32 %v2424, %v2481
      %v2483 = vpop.f32.mrb[0].mxu0
      %2484 = vmatprep.mubr.bf16.mxu0 0
      %2485 = vmatmul.mubr.bf16.gmra.mrb[0].mxu0 %v2442
      %v2486 = vpop.f32.mrb[0].mxu0
      %v2487 = vadd.f32 %v2424, %v2486
      %v2488 = vpop.f32.mrb[0].mxu0
      %v2489 = vpop.f32.mrb[0].mxu0
      %v2490 = vpop.f32.mrb[0].mxu0
      %2491 = vdwg.mxu0
      %v2495 = vrot.slane %v2482, 7
      %vm2496 = vcmask 1041409
      %v2497 = vsel %vm2496, %v2495, %v2479
      %v2498 = vrot.slane %v2487, 6
      %vm2499 = vcmask 1042434
      %v2500 = vsel %vm2499, %v2498, %v2497
      %v2502 = vrot.slane %v2479, 1
      %v2503 = vsel %vm2496, %v2482, %v2502
      %v2504 = vrot.slane %v2487, 7
      %v2505 = vsel %vm2499, %v2504, %v2503
      %2506 = vrot.lane.b32.xlu0 %v2505, 32
      %v2507 = vpop.permute.xlu0 %2506
      %v2509 = vrot.slane %v2479, 2
      %v2510 = vrot.slane %v2482, 1
      %v2511 = vsel %vm2496, %v2510, %v2509
      %v2512 = vsel %vm2499, %v2487, %v2511
      %2513 = vrot.lane.b32.xlu0 %v2512, 64
      %v2514 = vpop.permute.xlu0 %2513
      %v2516 = vrot.slane %v2479, 3
      %v2517 = vrot.slane %v2482, 2
      %v2518 = vsel %vm2496, %v2517, %v2516
      %v2519 = vrot.slane %v2487, 1
      %v2520 = vsel %vm2499, %v2519, %v2518
      %2521 = vrot.lane.b32.xlu0 %v2520, 96
      %v2522 = vpop.permute.xlu0 %2521
      %v2524 = vrot.slane %v2479, 4
      %v2525 = vrot.slane %v2482, 3
      %v2526 = vsel %vm2496, %v2525, %v2524
      %v2527 = vrot.slane %v2487, 2
      %v2528 = vsel %vm2499, %v2527, %v2526
      %v2530 = vrot.slane %v2479, 5
      %v2531 = vrot.slane %v2482, 4
      %v2532 = vsel %vm2496, %v2531, %v2530
      %v2533 = vrot.slane %v2487, 3
      %v2534 = vsel %vm2499, %v2533, %v2532
      %2535 = vrot.lane.b32.xlu0 %v2534, 32
      %v2536 = vpop.permute.xlu0 %2535
      %v2538 = vrot.slane %v2479, 6
      %v2539 = vrot.slane %v2482, 5
      %v2540 = vsel %vm2496, %v2539, %v2538
      %v2541 = vrot.slane %v2487, 4
      %v2542 = vsel %vm2499, %v2541, %v2540
      %2543 = vrot.lane.b32.xlu0 %v2542, 64
      %v2544 = vpop.permute.xlu0 %2543
      %v2546 = vrot.slane %v2479, 7
      %v2547 = vrot.slane %v2482, 6
      %v2548 = vsel %vm2496, %v2547, %v2546
      %v2549 = vrot.slane %v2487, 5
      %v2550 = vsel %vm2499, %v2549, %v2548
      %2551 = vrot.lane.b32.xlu0 %v2550, 96
      %v2552 = vpop.permute.xlu0 %2551
      %v2554 = vsel %vm598, %v2500, %v2507
      %v2555 = vsel %vm602, %v2554, %v2514
      %v2556 = vsel %vm663, %v2555, %v2522
      %v2557 = vsel %vm598, %v2528, %v2536
      %v2558 = vsel %vm602, %v2557, %v2544
      %v2559 = vsel %vm663, %v2558, %v2552
      %v2562 = vcombine.low %v2556, %v2559
      %2564 = vst [vmem:[%s546] sm:$0x77] %v2562
      %p2565 = scmp.lt.s32.totalorder %s27, 1
      %s2566 = scalar_select %p2565, %s27, 1
      %p2567 = scmp.lt.s32.totalorder %s28, 0
      %s2568 = scalar_select %p2567, %s28, 0
      %s2569 = smul.addr %s2568, 2
      %s2570 = smul.addr %s2566, 2
      %s2571 = sadd.s32 %s2569, %s2570
      %s2572 = smul.addr %s2571, 4
      %s2573 = scalar_lea.vmem %s12, %s2572
      // Predicated region
      $region69: #{tpu_custom_call.1} parent=67 // pred_check
        %p2574 = pneg %p333
      $region70: #{tpu_custom_call.1} parent=67 // pred_check_branch
        %2576 = sbr.rel (%p2574) target = $region72
      $region71: #{tpu_custom_call.1} parent=67 // pred_region
        _
      $region72: #{tpu_custom_call.1} parent=67 // pred_fallthru
        _
    $region68: #{tpu_custom_call.1} parent=5 // pred_fallthru
      _
    %p2577 = scmp.le.s32.totalorder 2, %s18
    // Predicated region
    $region73: #{tpu_custom_call.1} parent=5 // pred_check
      %p2578 = pneg %p2577
    $region74: #{tpu_custom_call.1} parent=5 // pred_check_branch
      %2580 = sbr.rel (%p2578) target = $region76
    $region75: #{tpu_custom_call.1} parent=5 // pred_region
      %s2581 = ssub.s32 %s18, 2
      // Predicated region
      $region77: #{tpu_custom_call.1} parent=75 // pred_check
        %p2582 = pneg %p339
      $region78: #{tpu_custom_call.1} parent=75 // pred_check_branch
        %2584 = sbr.rel (%p2582) target = $region80
      $region79: #{tpu_custom_call.1} parent=75 // pred_region
        %p2585 = scmp.lt.s32.totalorder %s29, 1
        %s2586 = scalar_select %p2585, %s29, 1
        %p2587 = scmp.lt.s32.totalorder %s30, 0
        %s2588 = scalar_select %p2587, %s30, 0
        %s2589 = smul.addr %s2588, 2
        %s2590 = smul.addr %s2586, 2
        %s2591 = sadd.s32 %s2589, %s2590
        %s2592 = smul.addr %s2591, 4
        %s2593 = scalar_lea.vmem %s12, %s2592
      $region80: #{tpu_custom_call.1} parent=75 // pred_fallthru
        _
    $region76: #{tpu_custom_call.1} parent=5 // pred_fallthru
      _
  $region6: #{tpu_custom_call.1} parent=0 // loop_footer
    %s22 = sadd.s32 1, %s18
  $region7: #{tpu_custom_call.1} parent=0 // loop_footer_branch
    %17 = sbr.rel target = $region3
  $region8: #{tpu_custom_call.1} parent=0 // loop_exit
    _

</llo_original>
